<compile_context>
chip_gen: v6e
topology: v6e:2x2x1
jax: 0.10.0
libtpu: 0.0.40
codegen_flags: <defaults>
</compile_context>

<pallas_src>
import functools

import numpy as np
import jax
import jax.numpy as jnp
from jax.experimental import pallas as pl
from jax.experimental.pallas import tpu as pltpu

# ---------------- config (the `opt` dict of the torch module) ----------------
OPT = dict(
    vocab_size=64, emb_dim=16, ner_dim=8, edge_dim=8,
    hidden_dim=32, num_class=5, time_steps=2, mlp_layers=2,
    pool_type="entity", pooling="max",
)
N_NER = 10          # len(constant.NER_TO_ID)
N_DEPREL = 50       # len(constant.DEPREL_TO_ID)  (indices 42, 43 are used by the model)
PAD_ID = 0
INF = 1e12          # constant.INFINITY_NUMBER
OUTW = 128          # lane-dense logits width (num_class padded to 128)


# =========================== fused Pallas kernel ===========================

def ggnn_fused_kernel(e_ref, a_ref, pm_ref, wx_ref, wg_ref, wh_ref, out_ref, *,
                      time_steps, B, N, H, E):
    """Whole batch in one invocation; all intermediates stay in VMEM/vregs.

    e_ref  : (2B, N, N, E)  stacked [e_i ; e_o]
    a_ref  : (2B, N, N)     stacked [A_i ; A_o]   (strictly 0/1)
    pm_ref : (2B, N)        stacked additive pool masks [subj ; obj]  (0 or -INF)
    wx_ref : (E+8, H)       rows 0:E = Wx, row E = bx, rest zero
    wg_ref : (4H+8, 4H)     rows 0:H   x_i gate weights [i|o|f|u]
                            rows H:2H  x_o gate weights
                            rows 2H:3H h_i gate weights (U_i)
                            rows 3H:4H h_o gate weights (U_o)
                            row  4H    gate bias [b_i|b_o|b_f|b_u]
    wh_ref : (152, 128)     rows 0:64 W1, 64 b1 | rows 72:104 W2, 104 b2 |
                            rows 112:144 Wc (cols 0:C), 144 bc
    out_ref: (B, 128)       lane-dense padded logits
    """
    f32 = jnp.float32
    BN = B * N

    a = a_ref[...]                                        # (2B, N, N)
    e = e_ref[...]                                        # (2B, N, N, E)

    # ---- xliner with the adjacency contracted BEFORE the matmul ----
    # x[n] = sum_m A[n,m] * (e[n,m] @ Wx + bx)  ==  (sum_m A[n,m] e[n,m]) @ Wx + deg[n]*bx
    a3 = a.reshape(2 * BN, N)                             # (2BN, N)
    e3 = e.reshape(2 * BN, N, E)                          # (2BN, N, E)
    ae = jnp.sum(a3[:, :, None] * e3, axis=1)             # (2BN, E)
    deg = jnp.sum(a3, axis=1, keepdims=True)              # (2BN, 1)
    wx = wx_ref[0:E, :]                                   # (E, H)
    bx = wx_ref[E:E + 1, :]                               # (1, H)
    x_flat = jnp.dot(ae, wx, preferred_element_type=f32) + deg * bx        # (2BN, H)

    # ---- State_LSTM: x-projection hoisted, recurrent part via associativity ----
    x_cat = jnp.concatenate([x_flat[0:BN, :], x_flat[BN:2 * BN, :]], axis=1)   # (BN, 2H)
    wxp = wg_ref[0:2 * H, :]                              # (2H, 4H)
    bg = wg_ref[4 * H:4 * H + 1, :]                       # (1, 4H)
    x_pre = (jnp.dot(x_cat, wxp, preferred_element_type=f32) + bg).reshape(B, N, 4 * H)

    u_i = wg_ref[2 * H:3 * H, :]                          # (H, 4H)
    u_o = wg_ref[3 * H:4 * H, :]                          # (H, 4H)
    a_i = a[0:B]                                          # (B, N, N)
    a_o = a[B:2 * B]                                      # (B, N, N)

    h = jnp.zeros((B, N, H), f32)
    c = jnp.zeros((B, N, H), f32)
    for _ in range(time_steps):                           # static, small, unrolled
        h_flat = h.reshape(BN, H)
        # (A @ h) @ U  ==  A @ (h @ U): keep every per-step product 128-lane wide,
        # no per-step lane concatenation.
        p_i = jnp.dot(h_flat, u_i, preferred_element_type=f32).reshape(B, N, 4 * H)
        p_o = jnp.dot(h_flat, u_o, preferred_element_type=f32).reshape(B, N, 4 * H)
        prop = (jnp.einsum('bnm,bmg->bng', a_i, p_i, preferred_element_type=f32)
                + jnp.einsum('bnm,bmg->bng', a_o, p_o, preferred_element_type=f32))
        gates = jax.nn.sigmoid(x_pre + prop)              # (B, N, 4H)
        g_i = gates[..., 0 * H:1 * H]
        g_o = gates[..., 1 * H:2 * H]
        g_f = gates[..., 2 * H:3 * H]
        g_u = gates[..., 3 * H:4 * H]                     # torch uses sigmoid for update too
        c = g_f * c + g_i * g_u
        h = g_o * jnp.tanh(c)

    # ---- head: masked max-pool (additive -INF mask), out_mlp, classifier ----
    pm = pm_ref[...]                                      # (2B, N)
    subj = jnp.max(h + pm[0:B][:, :, None], axis=1)       # (B, H)
    obj = jnp.max(h + pm[B:2 * B][:, :, None], axis=1)    # (B, H)

    ones = jnp.ones((B, 1), f32)
    zpad = jnp.zeros((B, 7), f32)
    feat = jnp.concatenate([subj, obj, ones, zpad], axis=1)                # (B, 2H+8)
    z = jnp.maximum(jnp.dot(feat, wh_ref[0:2 * H + 8, 0:H],
                            preferred_element_type=f32), 0.0)              # (B, H)
    z = jnp.concatenate([z, ones, zpad], axis=1)                           # (B, H+8)
    z = jnp.maximum(jnp.dot(z, wh_ref[2 * H + 8:3 * H + 16, 0:H],
                            preferred_element_type=f32), 0.0)              # (B, H)
    z = jnp.concatenate([z, ones, zpad], axis=1)                           # (B, H+8)
    out_ref[...] = jnp.dot(z, wh_ref[3 * H + 16:4 * H + 24, :],
                           preferred_element_type=f32)                     # (B, 128)


# =========================== pallas_call wrapper ===========================

def ggnn_forward(p, e_i, e_o, A_i, A_o, subj_mask, obj_mask, time_steps):
    bs, N, _, E = e_i.shape
    H = p["Wx"].shape[1]
    C = p["Wc"].shape[1]
    assert C <= OUTW

    f32 = jnp.float32

    # ---- weight packing (trace time, fused into as few operands as possible) ----
    # xliner slab: (E+8, H)  — Wx rows + bias row (+ zero padding rows)
    wx_slab = jnp.concatenate([p["Wx"], p["bx"], jnp.zeros((7, H), f32)], axis=0)

    # gate slab (4H+8, 4H): pack the 16 (H,H) LSTM weights + 4 biases.
    Wl = p["Wlstm"]
    wg_slab = jnp.concatenate([
        jnp.concatenate([Wl[0], Wl[4], Wl[8], Wl[12]], axis=1),    # x_i weights for gates i,o,f,u
        jnp.concatenate([Wl[1], Wl[5], Wl[9], Wl[13]], axis=1),    # x_o weights
        jnp.concatenate([Wl[2], Wl[6], Wl[10], Wl[14]], axis=1),   # h_i weights (U_i)
        jnp.concatenate([Wl[3], Wl[7], Wl[11], Wl[15]], axis=1),   # h_o weights (U_o)
        p["blstm"].reshape(1, 4 * H),                              # [b_i | b_o | b_f | b_u]
        jnp.zeros((7, 4 * H), f32),
    ], axis=0)

    # head slab (152, 128): out_mlp (2 layers) + classifier, biases folded via a ones column.
    def _pad_rows(w, rows):
        return jnp.pad(w, ((0, rows - w.shape[0]), (0, 0)))

    def _pad_cols(w, cols):
        return jnp.pad(w, ((0, 0), (0, cols - w.shape[1])))

    w1a = _pad_rows(jnp.concatenate([p["W1"], p["b1"]], axis=0), 2 * H + 8)   # (72, H)
    w2a = _pad_rows(jnp.concatenate([p["W2"], p["b2"]], axis=0), H + 8)       # (40, H)
    wca = _pad_rows(jnp.concatenate([p["Wc"], p["bc"]], axis=0), H + 8)       # (40, C)
    wh_slab = jnp.concatenate(
        [_pad_cols(w1a, OUTW), _pad_cols(w2a, OUTW), _pad_cols(wca, OUTW)], axis=0)   # (152, 128)

    # ---- data packing: fuse paired operands, precompute additive pool masks ----
    e_all = jnp.concatenate([e_i, e_o], axis=0).astype(f32)          # (2bs, N, N, E)
    a_all = jnp.concatenate([A_i, A_o], axis=0).astype(f32)          # (2bs, N, N)
    pmask = jnp.concatenate([subj_mask, obj_mask], axis=0).astype(f32) * jnp.float32(-INF)  # (2bs, N)

    kernel = functools.partial(ggnn_fused_kernel,
                               time_steps=time_steps, B=bs, N=N, H=H, E=E)

    # Whole batch in one fat grid step (all blocks == full arrays, everything in VMEM).
    # For a large batch, tile bs over this grid axis (and mark it CORE_PARALLEL on v7x).
    logits_pad = pl.pallas_call(
        kernel,
        grid=(1,),
        in_specs=[
            pl.BlockSpec((2 * bs, N, N, E), lambda i: (0, 0, 0, 0)),   # e (stacked)
            pl.BlockSpec((2 * bs, N, N), lambda i: (0, 0, 0)),         # A (stacked)
            pl.BlockSpec((2 * bs, N), lambda i: (0, 0)),               # additive pool masks
            pl.BlockSpec(wx_slab.shape, lambda i: (0, 0)),             # xliner slab
            pl.BlockSpec(wg_slab.shape, lambda i: (0, 0)),             # LSTM gate slab
            pl.BlockSpec(wh_slab.shape, lambda i: (0, 0)),             # head slab
        ],
        out_specs=pl.BlockSpec((bs, OUTW), lambda i: (0, 0)),
        out_shape=jax.ShapeDtypeStruct((bs, OUTW), f32),
        compiler_params=pltpu.CompilerParams(dimension_semantics=("arbitrary",)),
    )(e_all, a_all, pmask, wx_slab, wg_slab, wh_slab)

    logits = logits_pad[:, :C]                     # slice the real classes off the lane-dense slab

    # pool_type == 'entity'  =>  pooling_output = zeros like h   (torch: torch.zeros(h.size()))
    h_out = jnp.zeros((bs, N, H), f32)
    return logits, h_out


# =========================== pure-JAX reference (for validation) ===========================

def reference_forward(p, e_i, e_o, A_i, A_o, subj_mask, obj_mask, time_steps):
    x_i = jnp.einsum("bnme,eh->bnmh", e_i, p["Wx"]) + p["bx"][0]
    x_o = jnp.einsum("bnme,eh->bnmh", e_o, p["Wx"]) + p["bx"][0]
    x_i = jnp.where(A_i[..., None] > 0, x_i, 0.0).sum(axis=2)
    x_o = jnp.where(A_o[..., None] > 0, x_o, 0.0).sum(axis=2)

    Wl, bl = p["Wlstm"], p["blstm"]
    h_t = jnp.zeros_like(x_i)
    c_t = jnp.zeros_like(x_i)
    for _ in range(time_steps):
        h_i = jnp.einsum("bnm,bmh->bnh", A_i, h_t)
        h_o = jnp.einsum("bnm,bmh->bnh", A_o, h_t)

        def gate(w0, b0):
            return jax.nn.sigmoid(x_i @ Wl[w0] + x_o @ Wl[w0 + 1]
                                  + h_i @ Wl[w0 + 2] + h_o @ Wl[w0 + 3] + bl[b0])
        g_i, g_o, g_f, g_u = gate(0, 0), gate(4, 1), gate(8, 2), gate(12, 3)
        c_t = g_f * c_t + g_i * g_u
        h_t = g_o * jnp.tanh(c_t)

    subj = jnp.max(jnp.where(subj_mask[:, :, None] > 0, -INF, h_t), axis=1)
    obj = jnp.max(jnp.where(obj_mask[:, :, None] > 0, -INF, h_t), axis=1)
    feat = jnp.concatenate([subj, obj], axis=1)
    z = jax.nn.relu(feat @ p["W1"] + p["b1"][0])
    z = jax.nn.relu(z @ p["W2"] + p["b2"][0])
    return z @ p["Wc"] + p["bc"][0]


# =========================== host-side graph construction (mirrors the torch loops) ===========================

def build_graph(words, masks, ner, deprel, head):
    bs, N = words.shape
    l = (masks == 0).astype(np.int64).sum(1)
    z_i = lambda: np.zeros((bs, N, N), np.int64)
    rel_i_wds, rel_o_wds = z_i(), z_i()
    rel_i_ner, rel_o_ner = z_i(), z_i()
    rel_i_rel, rel_o_rel = z_i(), z_i()
    s_i_wds, s_o_wds, s_o1_wds = z_i(), z_i(), z_i()
    s_i_ner, s_o_ner, s_o1_ner = z_i(), z_i(), z_i()
    s_i_rel, s_o_rel, s_o1_rel = z_i(), z_i(), z_i()
    A_i = np.zeros((bs, N, N), np.float32)
    A_o = np.zeros((bs, N, N), np.float32)

    for i in range(bs):
        for j in range(N):
            if head[i][j] == 0:
                continue
            k = head[i][j] - 1
            rel_i_wds[i][k][j] = words[i][j]
            rel_i_ner[i][k][j] = ner[i][j]
            rel_i_rel[i][k][j] = deprel[i][j]
            rel_o_wds[i][j][k] = words[i][j]
            rel_o_ner[i][j][k] = ner[i][j]
            rel_o_rel[i][j][k] = deprel[i][j]
            A_i[i][k][j] = 1
            A_o[i][j][k] = 1

    for i, t in enumerate(l):
        for j in range(t):
            rel_i_wds[i][j][j] = words[i][j]
            rel_o_wds[i][j][j] = words[i][j]
            rel_i_ner[i][j][j] = ner[i][j]
            rel_o_ner[i][j][j] = ner[i][j]
            rel_i_rel[i][j][j] = 43
            rel_o_rel[i][j][j] = 43
            A_i[i][j][j] = 1
            A_o[i][j][j] = 1
            if j == 0 or j == t - 1:
                continue
            s_i_wds[i][j][j - 1] = words[i][j]
            s_i_wds[i][j][j + 1] = words[i][j]
            s_i_ner[i][j][j - 1] = ner[i][j]
            s_i_ner[i][j][j + 1] = ner[i][j]
            s_i_rel[i][j][j - 1] = 42
            s_i_rel[i][j][j + 1] = 42
            s_o_wds[i][j][j] = words[i][j]
            s_o_ner[i][j][j] = ner[i][j]
            s_o_rel[i][j][j] = 42
            A_i[i][j][j - 1] = 1
            A_i[i][j][j + 1] = 1
            A_o[i][j][j - 1] = 1
            A_o[i][j][j + 1] = 1
        s_i_wds[i][0][1] = words[i][0]
        s_o1_wds[i][0][0] = words[i][0]
        s_i_ner[i][0][1] = ner[i][0]
        s_o1_ner[i][0][0] = ner[i][0]
        s_i_rel[i][0][1] = 42
        s_o1_rel[i][0][0] = 42
        A_i[i][0][1] = 1
        A_o[i][0][1] = 1
        s_i_wds[i][t - 1][t - 2] = words[i][t - 1]
        s_o1_wds[i][t - 1][t - 1] = words[i][t - 1]
        s_i_ner[i][t - 1][t - 2] = ner[i][t - 1]
        s_o1_ner[i][t - 1][t - 1] = ner[i][t - 1]
        s_i_rel[i][t - 1][t - 2] = 42
        s_o1_rel[i][t - 1][t - 1] = 42
        A_i[i][t - 1][t - 2] = 1
        A_o[i][t - 1][t - 2] = 1

    idx = dict(rel_i_wds=rel_i_wds, rel_o_wds=rel_o_wds, rel_i_ner=rel_i_ner, rel_o_ner=rel_o_ner,
               rel_i_rel=rel_i_rel, rel_o_rel=rel_o_rel,
               s_i_wds=s_i_wds, s_o_wds=s_o_wds, s_o1_wds=s_o1_wds,
               s_i_ner=s_i_ner, s_o_ner=s_o_ner, s_o1_ner=s_o1_ner,
               s_i_rel=s_i_rel, s_o_rel=s_o_rel, s_o1_rel=s_o1_rel)
    return idx, A_i, A_o


# =========================== parameters ===========================

def init_params(key):
    H = OPT["hidden_dim"]
    e_dim = OPT["emb_dim"] + OPT["ner_dim"] + OPT["edge_dim"]
    C = OPT["num_class"]
    ks = jax.random.split(key, 32)
    ortho = jax.nn.initializers.orthogonal(scale=1.414)

    def linear(k, fi, fo):
        k1, k2 = jax.random.split(k)
        bound = 1.0 / np.sqrt(fi)
        W = jax.random.uniform(k1, (fi, fo), jnp.float32, -bound, bound)
        b = jax.random.uniform(k2, (1, fo), jnp.float32, -bound, bound)
        return W, b

    # embedding tables
    emb = jax.random.uniform(ks[0], (OPT["vocab_size"], OPT["emb_dim"]), jnp.float32, -1.0, 1.0)
    emb = emb.at[PAD_ID].set(0.0)                        # padding_idx
    ner_emb = jax.random.normal(ks[1], (N_NER, OPT["ner_dim"]), jnp.float32)
    rel_emb = jax.random.normal(ks[2], (N_DEPREL, OPT["edge_dim"]), jnp.float32)

    # State_LSTM: 16 orthogonal (H,H) matrices, 4 zero biases (exactly like the torch init)
    Wlstm = jnp.stack([ortho(k, (H, H), jnp.float32) for k in jax.random.split(ks[3], 16)])
    blstm = jnp.zeros((4, H), jnp.float32)

    Wx, bx = linear(ks[4], e_dim, H)                      # xliner
    W1, b1 = linear(ks[5], 2 * H, H)                      # out_mlp layer 0 ('entity' => in_dim=2H)
    W2, b2 = linear(ks[6], H, H)                          # out_mlp layer 1 (mlp_layers=2)
    Wc, bc = linear(ks[7], H, C)                          # classifier

    return dict(emb=emb, ner_emb=ner_emb, rel_emb=rel_emb, Wlstm=Wlstm, blstm=blstm,
                Wx=Wx, bx=bx, W1=W1, b1=b1, W2=W2, b2=b2, Wc=Wc, bc=bc)


# =========================== main ===========================

if __name__ == "__main__":
    key = jax.random.PRNGKey(0)
    k_par, k_w, k_n, k_d = jax.random.split(key, 4)

    bs, N = 2, 8
    params = init_params(k_par)

    # -------- deterministic synthetic inputs (the 11-tuple of the torch forward; unused ones omitted) --------
    l = np.array([8, 6], dtype=np.int64)
    masks = np.zeros((bs, N), np.int64)
    for i in range(bs):
        masks[i, l[i]:] = 1
    # np.array(...) makes WRITABLE host copies of the jax arrays.
    words = np.array(jax.random.randint(k_w, (bs, N), 1, OPT["vocab_size"]), dtype=np.int64)
    ner = np.array(jax.random.randint(k_n, (bs, N), 1, N_NER), dtype=np.int64)
    deprel = np.array(jax.random.randint(k_d, (bs, N), 1, 42), dtype=np.int64)
    head = np.zeros((bs, N), np.int64)
    for i in range(bs):
        words[i, l[i]:] = PAD_ID
        ner[i, l[i]:] = 0
        deprel[i, l[i]:] = 0
        head[i, 1:l[i]] = np.arange(1, l[i])              # token j's head is token j-1 (1-indexed), token 0 = root
    subj_pos = np.tile(np.arange(N) - 1, (bs, 1))         # subject at position 1
    obj_pos = np.tile(np.arange(N) - 4, (bs, 1))          # object at position 4

    # -------- graph construction + embedding gathers (host / JAX glue) --------
    # TODO(synk): data-dependent graph construction (per-token Python loops) has no clean Pallas equivalent.
    idx, A_i_np, A_o_np = build_graph(words, masks, ner, deprel, head)
    g = {k: jnp.asarray(v, jnp.int32) for k, v in idx.items()}
    A_i = jnp.asarray(A_i_np)
    A_o = jnp.asarray(A_o_np)

    emb, ner_e, rel_e = params["emb"], params["ner_emb"], params["rel_emb"]
    e_i_rel = rel_e[g["rel_i_rel"]] + rel_e[g["s_i_rel"]]
    e_i_wds = emb[g["rel_i_wds"]] + emb[g["s_i_wds"]]
    e_i_ner = ner_e[g["rel_i_ner"]] + ner_e[g["s_i_ner"]]
    e_o_rel = rel_e[g["rel_o_rel"]] + rel_e[g["s_o1_rel"]] + 2.0 * rel_e[g["s_o_rel"]]
    e_o_wds = emb[g["rel_o_wds"]] + emb[g["s_o1_wds"]] + 2.0 * emb[g["s_o_wds"]]
    e_o_ner = ner_e[g["rel_o_ner"]] + ner_e[g["s_o1_ner"]] + 2.0 * ner_e[g["s_o_ner"]]
    e_i = jnp.concatenate([e_i_rel, e_i_wds, e_i_ner], axis=3)
    e_o = jnp.concatenate([e_o_rel, e_o_wds, e_o_ner], axis=3)

    subj_mask = jnp.asarray((subj_pos != 0).astype(np.float32))   # subj_pos.eq(0).eq(0)
    obj_mask = jnp.asarray((obj_pos != 0).astype(np.float32))

    # -------- run fused Pallas kernel --------
    logits, pooling_output = ggnn_forward(params, e_i, e_o, A_i, A_o,
                                          subj_mask, obj_mask, OPT["time_steps"])
    logits = jax.block_until_ready(logits)
    pooling_output = jax.block_until_ready(pooling_output)

    # -------- validate against pure-JAX reference --------
    ref_logits = reference_forward(params, e_i, e_o, A_i, A_o,
                                   subj_mask, obj_mask, OPT["time_steps"])
    np.testing.assert_allclose(np.asarray(logits), np.asarray(ref_logits), rtol=5e-4, atol=5e-4)
    assert logits.shape == (bs, OPT["num_class"])
    assert pooling_output.shape == (bs, N, OPT["hidden_dim"])

    print("KERNEL_OK")
</pallas_src>

<mosaic_0001>
module attributes {stable_mosaic.version = 11 : i64} {
  func.func @ggnn_fused_kernel(%arg0: i32, %arg1: memref<4x8x8x32xf32, #tpu.memory_space<vmem>>, %arg2: memref<4x8x8xf32, #tpu.memory_space<vmem>>, %arg3: memref<4x8xf32, #tpu.memory_space<vmem>>, %arg4: memref<40x32xf32, #tpu.memory_space<vmem>>, %arg5: memref<136x128xf32, #tpu.memory_space<vmem>>, %arg6: memref<152x128xf32, #tpu.memory_space<vmem>>, %arg7: memref<2x128xf32, #tpu.memory_space<vmem>>) attributes {dimension_semantics = [#tpu.dimension_semantics<arbitrary>], iteration_bounds = array<i64: 1>, scalar_prefetch = 0 : i64, scratch_operands = 0 : i64, tpu.core_type = #tpu.core_type<tc>, window_params = [{pipeline_mode = #tpu.pipeline_mode<synchronous>, transform_indices = @transform_0, window_bounds = array<i64: 4, 8, 8, 32>}, {pipeline_mode = #tpu.pipeline_mode<synchronous>, transform_indices = @transform_1, window_bounds = array<i64: 4, 8, 8>}, {pipeline_mode = #tpu.pipeline_mode<synchronous>, transform_indices = @transform_2, window_bounds = array<i64: 4, 8>}, {pipeline_mode = #tpu.pipeline_mode<synchronous>, transform_indices = @transform_3, window_bounds = array<i64: 40, 32>}, {pipeline_mode = #tpu.pipeline_mode<synchronous>, transform_indices = @transform_4, window_bounds = array<i64: 136, 128>}, {pipeline_mode = #tpu.pipeline_mode<synchronous>, transform_indices = @transform_5, window_bounds = array<i64: 152, 128>}, {pipeline_mode = #tpu.pipeline_mode<synchronous>, transform_indices = @transform_6, window_bounds = array<i64: 2, 128>}]} {
    %c0 = arith.constant 0 : index
    %c0_0 = arith.constant 0 : index
    %c0_1 = arith.constant 0 : index
    %0 = vector.load %arg2[%c0, %c0_0, %c0_1] : memref<4x8x8xf32, #tpu.memory_space<vmem>>, vector<4x8x8xf32>
    %c0_2 = arith.constant 0 : index
    %c0_3 = arith.constant 0 : index
    %c0_4 = arith.constant 0 : index
    %c0_5 = arith.constant 0 : index
    %1 = vector.load %arg1[%c0_2, %c0_3, %c0_4, %c0_5] : memref<4x8x8x32xf32, #tpu.memory_space<vmem>>, vector<4x8x8x32xf32>
    %2 = vector.shape_cast %0 : vector<4x8x8xf32> to vector<32x8xf32>
    %3 = vector.shape_cast %1 : vector<4x8x8x32xf32> to vector<32x8x32xf32>
    %4 = vector.shape_cast %2 : vector<32x8xf32> to vector<32x8x1xf32>
    %5 = vector.broadcast %4 : vector<32x8x1xf32> to vector<32x8x32xf32>
    %6 = arith.mulf %5, %3 : vector<32x8x32xf32>
    %cst = arith.constant dense<0.000000e+00> : vector<32x32xf32>
    %7 = vector.multi_reduction <add>, %6, %cst [1] : vector<32x8x32xf32> to vector<32x32xf32>
    %cst_6 = arith.constant dense<0.000000e+00> : vector<32xf32>
    %8 = vector.multi_reduction <add>, %2, %cst_6 [1] : vector<32x8xf32> to vector<32xf32>
    %9 = vector.shape_cast %8 : vector<32xf32> to vector<32x1xf32>
    %c0_7 = arith.constant 0 : index
    %c0_8 = arith.constant 0 : index
    %10 = vector.load %arg4[%c0_7, %c0_8] : memref<40x32xf32, #tpu.memory_space<vmem>>, vector<32x32xf32>
    %c32 = arith.constant 32 : index
    %c0_9 = arith.constant 0 : index
    %11 = vector.load %arg4[%c32, %c0_9] : memref<40x32xf32, #tpu.memory_space<vmem>>, vector<1x32xf32>
    %cst_10 = arith.constant dense<0.000000e+00> : vector<32x32xf32>
    %12 = tpu.matmul %7, %10, %cst_10 {dimension_numbers = #tpu.dot_dimension_numbers<[1], [0], [0], [1], [0, 0, 1, 1], [], []>} : vector<32x32xf32>, vector<32x32xf32>, vector<32x32xf32> -> vector<32x32xf32>
    %13 = vector.broadcast %9 : vector<32x1xf32> to vector<32x32xf32>
    %14 = vector.broadcast %11 : vector<1x32xf32> to vector<32x32xf32>
    %15 = arith.mulf %13, %14 : vector<32x32xf32>
    %16 = arith.addf %12, %15 : vector<32x32xf32>
    %17 = vector.extract_strided_slice %16 {offsets = [0, 0], sizes = [16, 32], strides = [1, 1]} : vector<32x32xf32> to vector<16x32xf32>
    %18 = vector.extract_strided_slice %16 {offsets = [16, 0], sizes = [16, 32], strides = [1, 1]} : vector<32x32xf32> to vector<16x32xf32>
    %19 = tpu.concatenate %17, %18 in 1 : vector<16x32xf32>, vector<16x32xf32> -> vector<16x64xf32>
    %c0_11 = arith.constant 0 : index
    %c0_12 = arith.constant 0 : index
    %20 = vector.load %arg5[%c0_11, %c0_12] : memref<136x128xf32, #tpu.memory_space<vmem>>, vector<64x128xf32>
    %c128 = arith.constant 128 : index
    %c0_13 = arith.constant 0 : index
    %21 = vector.load %arg5[%c128, %c0_13] : memref<136x128xf32, #tpu.memory_space<vmem>>, vector<1x128xf32>
    %cst_14 = arith.constant dense<0.000000e+00> : vector<16x128xf32>
    %22 = tpu.matmul %19, %20, %cst_14 {dimension_numbers = #tpu.dot_dimension_numbers<[1], [0], [0], [1], [0, 0, 1, 1], [], []>} : vector<16x64xf32>, vector<64x128xf32>, vector<16x128xf32> -> vector<16x128xf32>
    %23 = vector.broadcast %21 : vector<1x128xf32> to vector<16x128xf32>
    %24 = arith.addf %22, %23 : vector<16x128xf32>
    %25 = vector.shape_cast %24 : vector<16x128xf32> to vector<2x8x128xf32>
    %c64 = arith.constant 64 : index
    %c0_15 = arith.constant 0 : index
    %26 = vector.load %arg5[%c64, %c0_15] : memref<136x128xf32, #tpu.memory_space<vmem>>, vector<32x128xf32>
    %c96 = arith.constant 96 : index
    %c0_16 = arith.constant 0 : index
    %27 = vector.load %arg5[%c96, %c0_16] : memref<136x128xf32, #tpu.memory_space<vmem>>, vector<32x128xf32>
    %28 = vector.extract_strided_slice %0 {offsets = [0, 0, 0], sizes = [2, 8, 8], strides = [1, 1, 1]} : vector<4x8x8xf32> to vector<2x8x8xf32>
    %29 = vector.extract_strided_slice %0 {offsets = [2, 0, 0], sizes = [2, 8, 8], strides = [1, 1, 1]} : vector<4x8x8xf32> to vector<2x8x8xf32>
    %cst_17 = arith.constant 0.000000e+00 : f32
    %30 = vector.broadcast %cst_17 : f32 to vector<2x8x32xf32>
    %cst_18 = arith.constant 0.000000e+00 : f32
    %31 = vector.broadcast %cst_18 : f32 to vector<2x8x32xf32>
    %32 = vector.shape_cast %30 : vector<2x8x32xf32> to vector<16x32xf32>
    %cst_19 = arith.constant dense<0.000000e+00> : vector<16x128xf32>
    %33 = tpu.matmul %32, %26, %cst_19 {dimension_numbers = #tpu.dot_dimension_numbers<[1], [0], [0], [1], [0, 0, 1, 1], [], []>} : vector<16x32xf32>, vector<32x128xf32>, vector<16x128xf32> -> vector<16x128xf32>
    %34 = vector.shape_cast %33 : vector<16x128xf32> to vector<2x8x128xf32>
    %cst_20 = arith.constant dense<0.000000e+00> : vector<16x128xf32>
    %35 = tpu.matmul %32, %27, %cst_20 {dimension_numbers = #tpu.dot_dimension_numbers<[1], [0], [0], [1], [0, 0, 1, 1], [], []>} : vector<16x32xf32>, vector<32x128xf32>, vector<16x128xf32> -> vector<16x128xf32>
    %36 = vector.shape_cast %35 : vector<16x128xf32> to vector<2x8x128xf32>
    "tpu.trace_start"() <{level = 10 : i32, message = "bnm,bmg->bng"}> : () -> ()
    %cst_21 = arith.constant dense<0.000000e+00> : vector<2x8x128xf32>
    %37 = tpu.matmul %28, %34, %cst_21 {dimension_numbers = #tpu.dot_dimension_numbers<[2], [1], [1], [2], [0, 0, 0, 1, 1, 2], [0], [0]>} : vector<2x8x8xf32>, vector<2x8x128xf32>, vector<2x8x128xf32> -> vector<2x8x128xf32>
    %cst_22 = arith.constant dense<0.000000e+00> : vector<2x8x128xf32>
    %38 = tpu.matmul %29, %36, %cst_22 {dimension_numbers = #tpu.dot_dimension_numbers<[2], [1], [1], [2], [0, 0, 0, 1, 1, 2], [0], [0]>} : vector<2x8x8xf32>, vector<2x8x128xf32>, vector<2x8x128xf32> -> vector<2x8x128xf32>
    "tpu.trace_stop"() : () -> ()
    %39 = arith.addf %37, %38 : vector<2x8x128xf32>
    %40 = arith.addf %25, %39 : vector<2x8x128xf32>
    %41 = arith.negf %40 : vector<2x8x128xf32>
    %42 = math.exp %41 : vector<2x8x128xf32>
    %cst_23 = arith.constant 1.000000e+00 : f32
    %43 = vector.broadcast %cst_23 : f32 to vector<2x8x128xf32>
    %44 = arith.addf %43, %42 : vector<2x8x128xf32>
    %45 = arith.divf %43, %44 : vector<2x8x128xf32>
    %46 = vector.extract_strided_slice %45 {offsets = [0, 0, 0], sizes = [2, 8, 32], strides = [1, 1, 1]} : vector<2x8x128xf32> to vector<2x8x32xf32>
    %47 = vector.extract_strided_slice %45 {offsets = [0, 0, 32], sizes = [2, 8, 32], strides = [1, 1, 1]} : vector<2x8x128xf32> to vector<2x8x32xf32>
    %48 = vector.extract_strided_slice %45 {offsets = [0, 0, 64], sizes = [2, 8, 32], strides = [1, 1, 1]} : vector<2x8x128xf32> to vector<2x8x32xf32>
    %49 = vector.extract_strided_slice %45 {offsets = [0, 0, 96], sizes = [2, 8, 32], strides = [1, 1, 1]} : vector<2x8x128xf32> to vector<2x8x32xf32>
    %50 = arith.mulf %48, %31 : vector<2x8x32xf32>
    %51 = arith.mulf %46, %49 : vector<2x8x32xf32>
    %52 = arith.addf %50, %51 : vector<2x8x32xf32>
    %53 = math.tanh %52 : vector<2x8x32xf32>
    %54 = arith.mulf %47, %53 : vector<2x8x32xf32>
    %55 = vector.shape_cast %54 : vector<2x8x32xf32> to vector<16x32xf32>
    %cst_24 = arith.constant dense<0.000000e+00> : vector<16x128xf32>
    %56 = tpu.matmul %55, %26, %cst_24 {dimension_numbers = #tpu.dot_dimension_numbers<[1], [0], [0], [1], [0, 0, 1, 1], [], []>} : vector<16x32xf32>, vector<32x128xf32>, vector<16x128xf32> -> vector<16x128xf32>
    %57 = vector.shape_cast %56 : vector<16x128xf32> to vector<2x8x128xf32>
    %cst_25 = arith.constant dense<0.000000e+00> : vector<16x128xf32>
    %58 = tpu.matmul %55, %27, %cst_25 {dimension_numbers = #tpu.dot_dimension_numbers<[1], [0], [0], [1], [0, 0, 1, 1], [], []>} : vector<16x32xf32>, vector<32x128xf32>, vector<16x128xf32> -> vector<16x128xf32>
    %59 = vector.shape_cast %58 : vector<16x128xf32> to vector<2x8x128xf32>
    "tpu.trace_start"() <{level = 10 : i32, message = "bnm,bmg->bng"}> : () -> ()
    %cst_26 = arith.constant dense<0.000000e+00> : vector<2x8x128xf32>
    %60 = tpu.matmul %28, %57, %cst_26 {dimension_numbers = #tpu.dot_dimension_numbers<[2], [1], [1], [2], [0, 0, 0, 1, 1, 2], [0], [0]>} : vector<2x8x8xf32>, vector<2x8x128xf32>, vector<2x8x128xf32> -> vector<2x8x128xf32>
    %cst_27 = arith.constant dense<0.000000e+00> : vector<2x8x128xf32>
    %61 = tpu.matmul %29, %59, %cst_27 {dimension_numbers = #tpu.dot_dimension_numbers<[2], [1], [1], [2], [0, 0, 0, 1, 1, 2], [0], [0]>} : vector<2x8x8xf32>, vector<2x8x128xf32>, vector<2x8x128xf32> -> vector<2x8x128xf32>
    "tpu.trace_stop"() : () -> ()
    %62 = arith.addf %60, %61 : vector<2x8x128xf32>
    %63 = arith.addf %25, %62 : vector<2x8x128xf32>
    %64 = arith.negf %63 : vector<2x8x128xf32>
    %65 = math.exp %64 : vector<2x8x128xf32>
    %cst_28 = arith.constant 1.000000e+00 : f32
    %66 = vector.broadcast %cst_28 : f32 to vector<2x8x128xf32>
    %67 = arith.addf %66, %65 : vector<2x8x128xf32>
    %68 = arith.divf %66, %67 : vector<2x8x128xf32>
    %69 = vector.extract_strided_slice %68 {offsets = [0, 0, 0], sizes = [2, 8, 32], strides = [1, 1, 1]} : vector<2x8x128xf32> to vector<2x8x32xf32>
    %70 = vector.extract_strided_slice %68 {offsets = [0, 0, 32], sizes = [2, 8, 32], strides = [1, 1, 1]} : vector<2x8x128xf32> to vector<2x8x32xf32>
    %71 = vector.extract_strided_slice %68 {offsets = [0, 0, 64], sizes = [2, 8, 32], strides = [1, 1, 1]} : vector<2x8x128xf32> to vector<2x8x32xf32>
    %72 = vector.extract_strided_slice %68 {offsets = [0, 0, 96], sizes = [2, 8, 32], strides = [1, 1, 1]} : vector<2x8x128xf32> to vector<2x8x32xf32>
    %73 = arith.mulf %71, %52 : vector<2x8x32xf32>
    %74 = arith.mulf %69, %72 : vector<2x8x32xf32>
    %75 = arith.addf %73, %74 : vector<2x8x32xf32>
    %76 = math.tanh %75 : vector<2x8x32xf32>
    %77 = arith.mulf %70, %76 : vector<2x8x32xf32>
    %c0_29 = arith.constant 0 : index
    %c0_30 = arith.constant 0 : index
    %78 = vector.load %arg3[%c0_29, %c0_30] : memref<4x8xf32, #tpu.memory_space<vmem>>, vector<4x8xf32>
    %79 = vector.extract_strided_slice %78 {offsets = [0, 0], sizes = [2, 8], strides = [1, 1]} : vector<4x8xf32> to vector<2x8xf32>
    %80 = vector.shape_cast %79 : vector<2x8xf32> to vector<2x8x1xf32>
    %81 = vector.broadcast %80 : vector<2x8x1xf32> to vector<2x8x32xf32>
    %82 = arith.addf %77, %81 : vector<2x8x32xf32>
    %cst_31 = arith.constant dense<0xFF800000> : vector<2x32xf32>
    %83 = vector.multi_reduction <maximumf>, %82, %cst_31 [1] : vector<2x8x32xf32> to vector<2x32xf32>
    %84 = vector.extract_strided_slice %78 {offsets = [2, 0], sizes = [2, 8], strides = [1, 1]} : vector<4x8xf32> to vector<2x8xf32>
    %85 = vector.shape_cast %84 : vector<2x8xf32> to vector<2x8x1xf32>
    %86 = vector.broadcast %85 : vector<2x8x1xf32> to vector<2x8x32xf32>
    %87 = arith.addf %77, %86 : vector<2x8x32xf32>
    %cst_32 = arith.constant dense<0xFF800000> : vector<2x32xf32>
    %88 = vector.multi_reduction <maximumf>, %87, %cst_32 [1] : vector<2x8x32xf32> to vector<2x32xf32>
    %cst_33 = arith.constant 1.000000e+00 : f32
    %89 = vector.broadcast %cst_33 : f32 to vector<2x1xf32>
    %cst_34 = arith.constant 0.000000e+00 : f32
    %90 = vector.broadcast %cst_34 : f32 to vector<2x7xf32>
    %91 = tpu.concatenate %83, %88, %89, %90 in 1 : vector<2x32xf32>, vector<2x32xf32>, vector<2x1xf32>, vector<2x7xf32> -> vector<2x72xf32>
    %c0_35 = arith.constant 0 : index
    %c0_36 = arith.constant 0 : index
    %92 = vector.load %arg6[%c0_35, %c0_36] : memref<152x128xf32, #tpu.memory_space<vmem>>, vector<72x32xf32>
    %cst_37 = arith.constant dense<0.000000e+00> : vector<2x32xf32>
    %93 = tpu.matmul %91, %92, %cst_37 {dimension_numbers = #tpu.dot_dimension_numbers<[1], [0], [0], [1], [0, 0, 1, 1], [], []>} : vector<2x72xf32>, vector<72x32xf32>, vector<2x32xf32> -> vector<2x32xf32>
    %cst_38 = arith.constant 0.000000e+00 : f32
    %94 = vector.broadcast %cst_38 : f32 to vector<2x32xf32>
    %95 = arith.maximumf %93, %94 : vector<2x32xf32>
    %96 = tpu.concatenate %95, %89, %90 in 1 : vector<2x32xf32>, vector<2x1xf32>, vector<2x7xf32> -> vector<2x40xf32>
    %c72 = arith.constant 72 : index
    %c0_39 = arith.constant 0 : index
    %97 = vector.load %arg6[%c72, %c0_39] : memref<152x128xf32, #tpu.memory_space<vmem>>, vector<40x32xf32>
    %cst_40 = arith.constant dense<0.000000e+00> : vector<2x32xf32>
    %98 = tpu.matmul %96, %97, %cst_40 {dimension_numbers = #tpu.dot_dimension_numbers<[1], [0], [0], [1], [0, 0, 1, 1], [], []>} : vector<2x40xf32>, vector<40x32xf32>, vector<2x32xf32> -> vector<2x32xf32>
    %cst_41 = arith.constant 0.000000e+00 : f32
    %99 = vector.broadcast %cst_41 : f32 to vector<2x32xf32>
    %100 = arith.maximumf %98, %99 : vector<2x32xf32>
    %101 = tpu.concatenate %100, %89, %90 in 1 : vector<2x32xf32>, vector<2x1xf32>, vector<2x7xf32> -> vector<2x40xf32>
    %c112 = arith.constant 112 : index
    %c0_42 = arith.constant 0 : index
    %102 = vector.load %arg6[%c112, %c0_42] : memref<152x128xf32, #tpu.memory_space<vmem>>, vector<40x128xf32>
    %cst_43 = arith.constant dense<0.000000e+00> : vector<2x128xf32>
    %103 = tpu.matmul %101, %102, %cst_43 {dimension_numbers = #tpu.dot_dimension_numbers<[1], [0], [0], [1], [0, 0, 1, 1], [], []>} : vector<2x40xf32>, vector<40x128xf32>, vector<2x128xf32> -> vector<2x128xf32>
    %c0_44 = arith.constant 0 : index
    %c0_45 = arith.constant 0 : index
    %104 = vector.load %arg7[%c0_44, %c0_45] : memref<2x128xf32, #tpu.memory_space<vmem>>, vector<2x128xf32>
    tpu.vector_store %arg7[%c0_44, %c0_45], %103 {strides = array<i32>} : memref<2x128xf32, #tpu.memory_space<vmem>>, vector<2x128xf32>,
    return
  }
  func.func @transform_0(%arg0: i32) -> (i32, i32, i32, i32) {
    %c0_i32 = arith.constant 0 : i32
    %c0_i32_0 = arith.constant 0 : i32
    %c0_i32_1 = arith.constant 0 : i32
    %c0_i32_2 = arith.constant 0 : i32
    %c0_i32_3 = arith.constant 0 : i32
    return %c0_i32, %c0_i32_0, %c0_i32_1, %c0_i32_2 : i32, i32, i32, i32
  }
  func.func @transform_1(%arg0: i32) -> (i32, i32, i32) {
    %c0_i32 = arith.constant 0 : i32
    %c0_i32_0 = arith.constant 0 : i32
    %c0_i32_1 = arith.constant 0 : i32
    %c0_i32_2 = arith.constant 0 : i32
    return %c0_i32, %c0_i32_0, %c0_i32_1 : i32, i32, i32
  }
  func.func @transform_2(%arg0: i32) -> (i32, i32) {
    %c0_i32 = arith.constant 0 : i32
    %c0_i32_0 = arith.constant 0 : i32
    %c0_i32_1 = arith.constant 0 : i32
    return %c0_i32, %c0_i32_0 : i32, i32
  }
  func.func @transform_3(%arg0: i32) -> (i32, i32) {
    %c0_i32 = arith.constant 0 : i32
    %c0_i32_0 = arith.constant 0 : i32
    %c0_i32_1 = arith.constant 0 : i32
    return %c0_i32, %c0_i32_0 : i32, i32
  }
  func.func @transform_4(%arg0: i32) -> (i32, i32) {
    %c0_i32 = arith.constant 0 : i32
    %c0_i32_0 = arith.constant 0 : i32
    %c0_i32_1 = arith.constant 0 : i32
    return %c0_i32, %c0_i32_0 : i32, i32
  }
  func.func @transform_5(%arg0: i32) -> (i32, i32) {
    %c0_i32 = arith.constant 0 : i32
    %c0_i32_0 = arith.constant 0 : i32
    %c0_i32_1 = arith.constant 0 : i32
    return %c0_i32, %c0_i32_0 : i32, i32
  }
  func.func @transform_6(%arg0: i32) -> (i32, i32) {
    %c0_i32 = arith.constant 0 : i32
    %c0_i32_0 = arith.constant 0 : i32
    %c0_i32_1 = arith.constant 0 : i32
    return %c0_i32, %c0_i32_0 : i32, i32
  }
}

</mosaic_0001>

<llo_original>
// kernel: tpu_custom_call.1
$region0: #{tpu_custom_call.1}
  #allocation0 [shape = 'u32[]', space=smem, size = 0x4, offset = 0x4, fixed_abs, tag = 'smem constant byte address 0x4 - core index']
  #allocation1 [shape = 'u32[144,128]{1,0:T(1,128)}', space=vmem, size = 0x12000, scoped, tag = 'internal scratch']
  %s0 = inlined_call_operand.hbm [shape: f32[4,8,8,32], index: 0, kind: input, shape index: {}]
  %s1 = inlined_call_operand.vmem [shape: f32[4,8,8], index: 1, kind: input, shape index: {}]
  %s2 = inlined_call_operand.vmem [shape: f32[4,8], index: 2, kind: input, shape index: {}]
  %s3 = inlined_call_operand.vmem [shape: f32[40,32], index: 3, kind: input, shape index: {}]
  %s4 = inlined_call_operand.hbm [shape: f32[136,128], index: 4, kind: input, shape index: {}]
  %s5 = inlined_call_operand.hbm [shape: f32[152,128], index: 5, kind: input, shape index: {}]
  %s6 = inlined_call_operand.hbm [shape: f32[2,128], index: 6, kind: output, shape index: {}]
  %s7 = sld [smem:[#allocation0]]
  $region46: #{tpu_custom_call.1} parent=0
    _
  %s9 = ssub.s32 1, %s7
  %s10 = scalar_select 0, %s9, %s7
  $region1: #{tpu_custom_call.1} parent=0
    #allocation2 [shape = 'u8[131072]{0}', space=vmem, size = 0x20000, scoped, tag = 'input window, operand 0, single buffered']
    #allocation3 [shape = 's32[1]{0}', space=sflag, size = 0x4, scoped, tag = 'scoped memory for tpu_custom_call.1']
    #allocation4 [shape = 's32[1]{0}', space=sflag, size = 0x4, scoped, tag = 'scoped memory for tpu_custom_call.1']
    #allocation5 [shape = 'u8[69632]{0}', space=vmem, size = 0x11000, scoped, tag = 'input window, operand 4, single buffered']
    #allocation6 [shape = 's32[1]{0}', space=sflag, size = 0x4, scoped, tag = 'scoped memory for tpu_custom_call.1']
    #allocation7 [shape = 'u8[77824]{0}', space=vmem, size = 0x13000, scoped, tag = 'input window, operand 5, single buffered']
    #allocation8 [shape = 'u8[1024]{0}', space=vmem, size = 0x400, scoped, tag = 'output window, operand 0, single buffered']
    %11 = vsyncpa [#allocation3], 0
    %12 = vsyncpa [#allocation6], 0
    %13 = vsyncpa [#allocation4], 0
    // Predicated region
    $region2: #{tpu_custom_call.1} parent=1 // pred_check
      _
    $region3: #{tpu_custom_call.1} parent=1 // pred_check_branch
      %15 = sbr.rel (0) target = $region5
    $region4: #{tpu_custom_call.1} parent=1 // pred_region
      %s17 = ssub.s32 4096, 4096
      %18 = vsyncadd [#allocation3], %s17
      %s19 = sshll.u32 [#allocation2], 4
      %s20 = int_to_ptr.vmem [resolvable:$true] %s19
      %25 = dma.hbm_to_vmem [thread:$0]  %s0, 4096, %s20, [#allocation3], 128, 128, 8
    $region5: #{tpu_custom_call.1} parent=1 // pred_fallthru
      _
    // Predicated region
    $region6: #{tpu_custom_call.1} parent=1 // pred_check
      _
    $region7: #{tpu_custom_call.1} parent=1 // pred_check_branch
      %27 = sbr.rel (0) target = $region9
    $region8: #{tpu_custom_call.1} parent=1 // pred_region
      _
    $region9: #{tpu_custom_call.1} parent=1 // pred_fallthru
      _
    // Predicated region
    $region10: #{tpu_custom_call.1} parent=1 // pred_check
      _
    $region11: #{tpu_custom_call.1} parent=1 // pred_check_branch
      %29 = sbr.rel (0) target = $region13
    $region12: #{tpu_custom_call.1} parent=1 // pred_region
      _
    $region13: #{tpu_custom_call.1} parent=1 // pred_fallthru
      _
    // Predicated region
    $region14: #{tpu_custom_call.1} parent=1 // pred_check
      _
    $region15: #{tpu_custom_call.1} parent=1 // pred_check_branch
      %31 = sbr.rel (0) target = $region17
    $region16: #{tpu_custom_call.1} parent=1 // pred_region
      _
    $region17: #{tpu_custom_call.1} parent=1 // pred_fallthru
      _
    // Predicated region
    $region18: #{tpu_custom_call.1} parent=1 // pred_check
      _
    $region19: #{tpu_custom_call.1} parent=1 // pred_check_branch
      %33 = sbr.rel (0) target = $region21
    $region20: #{tpu_custom_call.1} parent=1 // pred_region
      %s35 = ssub.s32 2176, 2176
      %36 = vsyncadd [#allocation6], %s35
      %s37 = sshll.u32 [#allocation5], 4
      %s38 = int_to_ptr.vmem [resolvable:$true] %s37
      %43 = dma.hbm_to_vmem [thread:$0]  %s4, 2176, %s38, [#allocation6], 128, 128, 8
    $region21: #{tpu_custom_call.1} parent=1 // pred_fallthru
      _
    // Predicated region
    $region22: #{tpu_custom_call.1} parent=1 // pred_check
      _
    $region23: #{tpu_custom_call.1} parent=1 // pred_check_branch
      %45 = sbr.rel (0) target = $region25
    $region24: #{tpu_custom_call.1} parent=1 // pred_region
      %s47 = ssub.s32 2432, 2432
      %48 = vsyncadd [#allocation6], %s47
      %s49 = sshll.u32 [#allocation7], 4
      %s50 = int_to_ptr.vmem [resolvable:$true] %s49
      %55 = dma.hbm_to_vmem [thread:$0]  %s5, 2432, %s50, [#allocation6], 128, 128, 8
    $region25: #{tpu_custom_call.1} parent=1 // pred_fallthru
      _
    // Predicated region
    $region26: #{tpu_custom_call.1} parent=1 // pred_check
      _
    $region27: #{tpu_custom_call.1} parent=1 // pred_check_branch
      %57 = sbr.rel (0) target = $region29
    $region28: #{tpu_custom_call.1} parent=1 // pred_region
      %58 = dma.done [#allocation3], 4096
    $region29: #{tpu_custom_call.1} parent=1 // pred_fallthru
      _
    // Predicated region
    $region30: #{tpu_custom_call.1} parent=1 // pred_check
      _
    $region31: #{tpu_custom_call.1} parent=1 // pred_check_branch
      %60 = sbr.rel (0) target = $region33
    $region32: #{tpu_custom_call.1} parent=1 // pred_region
      %61 = dma.done [#allocation6], 2176
    $region33: #{tpu_custom_call.1} parent=1 // pred_fallthru
      _
    // Predicated region
    $region34: #{tpu_custom_call.1} parent=1 // pred_check
      _
    $region35: #{tpu_custom_call.1} parent=1 // pred_check_branch
      %63 = sbr.rel (0) target = $region37
    $region36: #{tpu_custom_call.1} parent=1 // pred_region
      %64 = dma.done [#allocation6], 2432
    $region37: #{tpu_custom_call.1} parent=1 // pred_fallthru
      _
    %v65 = vld [vmem:[%s1] sm:$0xff]
    %v66 = vld [vmem:[%s1 + $0x8] sm:$0xff]
    %v67 = vld [vmem:[%s1 + $0x10] sm:$0xff]
    %v68 = vld [vmem:[%s1 + $0x18] sm:$0xff]
    %v69 = vld [vmem:[#allocation2] sm:$0xff]
    %v70 = vld [vmem:[#allocation2 + $0x8] sm:$0xff]
    %v71 = vld [vmem:[#allocation2 + $0x10] sm:$0xff]
    %v72 = vld [vmem:[#allocation2 + $0x18] sm:$0xff]
    %v73 = vld [vmem:[#allocation2 + $0x20] sm:$0xff]
    %v74 = vld [vmem:[#allocation2 + $0x28] sm:$0xff]
    %v75 = vld [vmem:[#allocation2 + $0x30] sm:$0xff]
    %v76 = vld [vmem:[#allocation2 + $0x38] sm:$0xff]
    %v77 = vld [vmem:[#allocation2 + $0x40] sm:$0xff]
    %v78 = vld [vmem:[#allocation2 + $0x48] sm:$0xff]
    %v79 = vld [vmem:[#allocation2 + $0x50] sm:$0xff]
    %v80 = vld [vmem:[#allocation2 + $0x58] sm:$0xff]
    %v81 = vld [vmem:[#allocation2 + $0x60] sm:$0xff]
    %v82 = vld [vmem:[#allocation2 + $0x68] sm:$0xff]
    %v83 = vld [vmem:[#allocation2 + $0x70] sm:$0xff]
    %v84 = vld [vmem:[#allocation2 + $0x78] sm:$0xff]
    %v85 = vld [vmem:[#allocation2 + $0x80] sm:$0xff]
    %v86 = vld [vmem:[#allocation2 + $0x88] sm:$0xff]
    %v87 = vld [vmem:[#allocation2 + $0x90] sm:$0xff]
    %v88 = vld [vmem:[#allocation2 + $0x98] sm:$0xff]
    %v89 = vld [vmem:[#allocation2 + $0xa0] sm:$0xff]
    %v90 = vld [vmem:[#allocation2 + $0xa8] sm:$0xff]
    %v91 = vld [vmem:[#allocation2 + $0xb0] sm:$0xff]
    %v92 = vld [vmem:[#allocation2 + $0xb8] sm:$0xff]
    %v93 = vld [vmem:[#allocation2 + $0xc0] sm:$0xff]
    %v94 = vld [vmem:[#allocation2 + $0xc8] sm:$0xff]
    %v95 = vld [vmem:[#allocation2 + $0xd0] sm:$0xff]
    %v96 = vld [vmem:[#allocation2 + $0xd8] sm:$0xff]
    %v97 = vld [vmem:[#allocation2 + $0xe0] sm:$0xff]
    %v98 = vld [vmem:[#allocation2 + $0xe8] sm:$0xff]
    %v99 = vld [vmem:[#allocation2 + $0xf0] sm:$0xff]
    %v100 = vld [vmem:[#allocation2 + $0xf8] sm:$0xff]
    %v101 = vlaneseq
    %v102 = vshrl.u32 %v101, 7
    %v103 = vsub.s32 0, %v102
    %v104 = vrot.slane %v65, %v103
    %106 = vbcast.lane.b32.xlu0 %v104, 256
    %v107 = vpop.permute.xlu0 %106
    %v108 = vlaneseq
    %v109 = vshrl.u32 %v108, 7
    %v110 = vsub.s32 1, %v109
    %v111 = vrot.slane %v65, %v110
    %113 = vbcast.lane.b32.xlu0 %v111, 256
    %v114 = vpop.permute.xlu0 %113
    %v115 = vlaneseq
    %v116 = vshrl.u32 %v115, 7
    %v117 = vsub.s32 2, %v116
    %v118 = vrot.slane %v65, %v117
    %120 = vbcast.lane.b32.xlu0 %v118, 256
    %v121 = vpop.permute.xlu0 %120
    %v122 = vlaneseq
    %v123 = vshrl.u32 %v122, 7
    %v124 = vsub.s32 3, %v123
    %v125 = vrot.slane %v65, %v124
    %127 = vbcast.lane.b32.xlu0 %v125, 256
    %v128 = vpop.permute.xlu0 %127
    %v129 = vlaneseq
    %v130 = vshrl.u32 %v129, 7
    %v131 = vsub.s32 4, %v130
    %v132 = vrot.slane %v65, %v131
    %134 = vbcast.lane.b32.xlu0 %v132, 256
    %v135 = vpop.permute.xlu0 %134
    %v136 = vlaneseq
    %v137 = vshrl.u32 %v136, 7
    %v138 = vsub.s32 5, %v137
    %v139 = vrot.slane %v65, %v138
    %141 = vbcast.lane.b32.xlu0 %v139, 256
    %v142 = vpop.permute.xlu0 %141
    %v143 = vlaneseq
    %v144 = vshrl.u32 %v143, 7
    %v145 = vsub.s32 6, %v144
    %v146 = vrot.slane %v65, %v145
    %148 = vbcast.lane.b32.xlu0 %v146, 256
    %v149 = vpop.permute.xlu0 %148
    %v150 = vlaneseq
    %v151 = vshrl.u32 %v150, 7
    %v152 = vsub.s32 7, %v151
    %v153 = vrot.slane %v65, %v152
    %155 = vbcast.lane.b32.xlu0 %v153, 256
    %v156 = vpop.permute.xlu0 %155
    %v157 = vlaneseq
    %v158 = vshrl.u32 %v157, 7
    %v159 = vsub.s32 0, %v158
    %v160 = vrot.slane %v66, %v159
    %162 = vbcast.lane.b32.xlu0 %v160, 256
    %v163 = vpop.permute.xlu0 %162
    %v164 = vlaneseq
    %v165 = vshrl.u32 %v164, 7
    %v166 = vsub.s32 1, %v165
    %v167 = vrot.slane %v66, %v166
    %169 = vbcast.lane.b32.xlu0 %v167, 256
    %v170 = vpop.permute.xlu0 %169
    %v171 = vlaneseq
    %v172 = vshrl.u32 %v171, 7
    %v173 = vsub.s32 2, %v172
    %v174 = vrot.slane %v66, %v173
    %176 = vbcast.lane.b32.xlu0 %v174, 256
    %v177 = vpop.permute.xlu0 %176
    %v178 = vlaneseq
    %v179 = vshrl.u32 %v178, 7
    %v180 = vsub.s32 3, %v179
    %v181 = vrot.slane %v66, %v180
    %183 = vbcast.lane.b32.xlu0 %v181, 256
    %v184 = vpop.permute.xlu0 %183
    %v185 = vlaneseq
    %v186 = vshrl.u32 %v185, 7
    %v187 = vsub.s32 4, %v186
    %v188 = vrot.slane %v66, %v187
    %190 = vbcast.lane.b32.xlu0 %v188, 256
    %v191 = vpop.permute.xlu0 %190
    %v192 = vlaneseq
    %v193 = vshrl.u32 %v192, 7
    %v194 = vsub.s32 5, %v193
    %v195 = vrot.slane %v66, %v194
    %197 = vbcast.lane.b32.xlu0 %v195, 256
    %v198 = vpop.permute.xlu0 %197
    %v199 = vlaneseq
    %v200 = vshrl.u32 %v199, 7
    %v201 = vsub.s32 6, %v200
    %v202 = vrot.slane %v66, %v201
    %204 = vbcast.lane.b32.xlu0 %v202, 256
    %v205 = vpop.permute.xlu0 %204
    %v206 = vlaneseq
    %v207 = vshrl.u32 %v206, 7
    %v208 = vsub.s32 7, %v207
    %v209 = vrot.slane %v66, %v208
    %211 = vbcast.lane.b32.xlu0 %v209, 256
    %v212 = vpop.permute.xlu0 %211
    %v213 = vlaneseq
    %v214 = vshrl.u32 %v213, 7
    %v215 = vsub.s32 0, %v214
    %v216 = vrot.slane %v67, %v215
    %218 = vbcast.lane.b32.xlu0 %v216, 256
    %v219 = vpop.permute.xlu0 %218
    %v220 = vlaneseq
    %v221 = vshrl.u32 %v220, 7
    %v222 = vsub.s32 1, %v221
    %v223 = vrot.slane %v67, %v222
    %225 = vbcast.lane.b32.xlu0 %v223, 256
    %v226 = vpop.permute.xlu0 %225
    %v227 = vlaneseq
    %v228 = vshrl.u32 %v227, 7
    %v229 = vsub.s32 2, %v228
    %v230 = vrot.slane %v67, %v229
    %232 = vbcast.lane.b32.xlu0 %v230, 256
    %v233 = vpop.permute.xlu0 %232
    %v234 = vlaneseq
    %v235 = vshrl.u32 %v234, 7
    %v236 = vsub.s32 3, %v235
    %v237 = vrot.slane %v67, %v236
    %239 = vbcast.lane.b32.xlu0 %v237, 256
    %v240 = vpop.permute.xlu0 %239
    %v241 = vlaneseq
    %v242 = vshrl.u32 %v241, 7
    %v243 = vsub.s32 4, %v242
    %v244 = vrot.slane %v67, %v243
    %246 = vbcast.lane.b32.xlu0 %v244, 256
    %v247 = vpop.permute.xlu0 %246
    %v248 = vlaneseq
    %v249 = vshrl.u32 %v248, 7
    %v250 = vsub.s32 5, %v249
    %v251 = vrot.slane %v67, %v250
    %253 = vbcast.lane.b32.xlu0 %v251, 256
    %v254 = vpop.permute.xlu0 %253
    %v255 = vlaneseq
    %v256 = vshrl.u32 %v255, 7
    %v257 = vsub.s32 6, %v256
    %v258 = vrot.slane %v67, %v257
    %260 = vbcast.lane.b32.xlu0 %v258, 256
    %v261 = vpop.permute.xlu0 %260
    %v262 = vlaneseq
    %v263 = vshrl.u32 %v262, 7
    %v264 = vsub.s32 7, %v263
    %v265 = vrot.slane %v67, %v264
    %267 = vbcast.lane.b32.xlu0 %v265, 256
    %v268 = vpop.permute.xlu0 %267
    %v269 = vlaneseq
    %v270 = vshrl.u32 %v269, 7
    %v271 = vsub.s32 0, %v270
    %v272 = vrot.slane %v68, %v271
    %274 = vbcast.lane.b32.xlu0 %v272, 256
    %v275 = vpop.permute.xlu0 %274
    %v276 = vlaneseq
    %v277 = vshrl.u32 %v276, 7
    %v278 = vsub.s32 1, %v277
    %v279 = vrot.slane %v68, %v278
    %281 = vbcast.lane.b32.xlu0 %v279, 256
    %v282 = vpop.permute.xlu0 %281
    %v283 = vlaneseq
    %v284 = vshrl.u32 %v283, 7
    %v285 = vsub.s32 2, %v284
    %v286 = vrot.slane %v68, %v285
    %288 = vbcast.lane.b32.xlu0 %v286, 256
    %v289 = vpop.permute.xlu0 %288
    %v290 = vlaneseq
    %v291 = vshrl.u32 %v290, 7
    %v292 = vsub.s32 3, %v291
    %v293 = vrot.slane %v68, %v292
    %295 = vbcast.lane.b32.xlu0 %v293, 256
    %v296 = vpop.permute.xlu0 %295
    %v297 = vlaneseq
    %v298 = vshrl.u32 %v297, 7
    %v299 = vsub.s32 4, %v298
    %v300 = vrot.slane %v68, %v299
    %302 = vbcast.lane.b32.xlu0 %v300, 256
    %v303 = vpop.permute.xlu0 %302
    %v304 = vlaneseq
    %v305 = vshrl.u32 %v304, 7
    %v306 = vsub.s32 5, %v305
    %v307 = vrot.slane %v68, %v306
    %309 = vbcast.lane.b32.xlu0 %v307, 256
    %v310 = vpop.permute.xlu0 %309
    %v311 = vlaneseq
    %v312 = vshrl.u32 %v311, 7
    %v313 = vsub.s32 6, %v312
    %v314 = vrot.slane %v68, %v313
    %316 = vbcast.lane.b32.xlu0 %v314, 256
    %v317 = vpop.permute.xlu0 %316
    %v318 = vlaneseq
    %v319 = vshrl.u32 %v318, 7
    %v320 = vsub.s32 7, %v319
    %v321 = vrot.slane %v68, %v320
    %323 = vbcast.lane.b32.xlu0 %v321, 256
    %v324 = vpop.permute.xlu0 %323
    %v325 = vmul.f32 %v107, %v69
    %v326 = vmul.f32 %v114, %v70
    %v327 = vmul.f32 %v121, %v71
    %v328 = vmul.f32 %v128, %v72
    %v329 = vmul.f32 %v135, %v73
    %v330 = vmul.f32 %v142, %v74
    %v331 = vmul.f32 %v149, %v75
    %v332 = vmul.f32 %v156, %v76
    %v333 = vmul.f32 %v163, %v77
    %v334 = vmul.f32 %v170, %v78
    %v335 = vmul.f32 %v177, %v79
    %v336 = vmul.f32 %v184, %v80
    %v337 = vmul.f32 %v191, %v81
    %v338 = vmul.f32 %v198, %v82
    %v339 = vmul.f32 %v205, %v83
    %v340 = vmul.f32 %v212, %v84
    %v341 = vmul.f32 %v219, %v85
    %v342 = vmul.f32 %v226, %v86
    %v343 = vmul.f32 %v233, %v87
    %v344 = vmul.f32 %v240, %v88
    %v345 = vmul.f32 %v247, %v89
    %v346 = vmul.f32 %v254, %v90
    %v347 = vmul.f32 %v261, %v91
    %v348 = vmul.f32 %v268, %v92
    %v349 = vmul.f32 %v275, %v93
    %v350 = vmul.f32 %v282, %v94
    %v351 = vmul.f32 %v289, %v95
    %v352 = vmul.f32 %v296, %v96
    %v353 = vmul.f32 %v303, %v97
    %v354 = vmul.f32 %v310, %v98
    %v355 = vmul.f32 %v317, %v99
    %v356 = vmul.f32 %v324, %v100
    %vm357 = vcmask 261120
    %v358 = vsel %vm357, %v325, 0.0
    %v359 = vrot.slane %v358, 4
    %v360 = vadd.f32 %v358, %v359
    %v361 = vrot.slane %v360, 2
    %v362 = vadd.f32 %v360, %v361
    %v363 = vrot.slane %v362, 1
    %v364 = vadd.f32 %v362, %v363
    %v365 = vsel %vm357, %v326, 0.0
    %v366 = vrot.slane %v365, 4
    %v367 = vadd.f32 %v365, %v366
    %v368 = vrot.slane %v367, 2
    %v369 = vadd.f32 %v367, %v368
    %v370 = vrot.slane %v369, 1
    %v371 = vadd.f32 %v369, %v370
    %v372 = vsel %vm357, %v327, 0.0
    %v373 = vrot.slane %v372, 4
    %v374 = vadd.f32 %v372, %v373
    %v375 = vrot.slane %v374, 2
    %v376 = vadd.f32 %v374, %v375
    %v377 = vrot.slane %v376, 1
    %v378 = vadd.f32 %v376, %v377
    %v379 = vsel %vm357, %v328, 0.0
    %v380 = vrot.slane %v379, 4
    %v381 = vadd.f32 %v379, %v380
    %v382 = vrot.slane %v381, 2
    %v383 = vadd.f32 %v381, %v382
    %v384 = vrot.slane %v383, 1
    %v385 = vadd.f32 %v383, %v384
    %v386 = vsel %vm357, %v329, 0.0
    %v387 = vrot.slane %v386, 4
    %v388 = vadd.f32 %v386, %v387
    %v389 = vrot.slane %v388, 2
    %v390 = vadd.f32 %v388, %v389
    %v391 = vrot.slane %v390, 1
    %v392 = vadd.f32 %v390, %v391
    %v393 = vsel %vm357, %v330, 0.0
    %v394 = vrot.slane %v393, 4
    %v395 = vadd.f32 %v393, %v394
    %v396 = vrot.slane %v395, 2
    %v397 = vadd.f32 %v395, %v396
    %v398 = vrot.slane %v397, 1
    %v399 = vadd.f32 %v397, %v398
    %v400 = vsel %vm357, %v331, 0.0
    %v401 = vrot.slane %v400, 4
    %v402 = vadd.f32 %v400, %v401
    %v403 = vrot.slane %v402, 2
    %v404 = vadd.f32 %v402, %v403
    %v405 = vrot.slane %v404, 1
    %v406 = vadd.f32 %v404, %v405
    %v407 = vsel %vm357, %v332, 0.0
    %v408 = vrot.slane %v407, 4
    %v409 = vadd.f32 %v407, %v408
    %v410 = vrot.slane %v409, 2
    %v411 = vadd.f32 %v409, %v410
    %v412 = vrot.slane %v411, 1
    %v413 = vadd.f32 %v411, %v412
    %v414 = vsel %vm357, %v333, 0.0
    %v415 = vrot.slane %v414, 4
    %v416 = vadd.f32 %v414, %v415
    %v417 = vrot.slane %v416, 2
    %v418 = vadd.f32 %v416, %v417
    %v419 = vrot.slane %v418, 1
    %v420 = vadd.f32 %v418, %v419
    %v421 = vsel %vm357, %v334, 0.0
    %v422 = vrot.slane %v421, 4
    %v423 = vadd.f32 %v421, %v422
    %v424 = vrot.slane %v423, 2
    %v425 = vadd.f32 %v423, %v424
    %v426 = vrot.slane %v425, 1
    %v427 = vadd.f32 %v425, %v426
    %v428 = vsel %vm357, %v335, 0.0
    %v429 = vrot.slane %v428, 4
    %v430 = vadd.f32 %v428, %v429
    %v431 = vrot.slane %v430, 2
    %v432 = vadd.f32 %v430, %v431
    %v433 = vrot.slane %v432, 1
    %v434 = vadd.f32 %v432, %v433
    %v435 = vsel %vm357, %v336, 0.0
    %v436 = vrot.slane %v435, 4
    %v437 = vadd.f32 %v435, %v436
    %v438 = vrot.slane %v437, 2
    %v439 = vadd.f32 %v437, %v438
    %v440 = vrot.slane %v439, 1
    %v441 = vadd.f32 %v439, %v440
    %v442 = vsel %vm357, %v337, 0.0
    %v443 = vrot.slane %v442, 4
    %v444 = vadd.f32 %v442, %v443
    %v445 = vrot.slane %v444, 2
    %v446 = vadd.f32 %v444, %v445
    %v447 = vrot.slane %v446, 1
    %v448 = vadd.f32 %v446, %v447
    %v449 = vsel %vm357, %v338, 0.0
    %v450 = vrot.slane %v449, 4
    %v451 = vadd.f32 %v449, %v450
    %v452 = vrot.slane %v451, 2
    %v453 = vadd.f32 %v451, %v452
    %v454 = vrot.slane %v453, 1
    %v455 = vadd.f32 %v453, %v454
    %v456 = vsel %vm357, %v339, 0.0
    %v457 = vrot.slane %v456, 4
    %v458 = vadd.f32 %v456, %v457
    %v459 = vrot.slane %v458, 2
    %v460 = vadd.f32 %v458, %v459
    %v461 = vrot.slane %v460, 1
    %v462 = vadd.f32 %v460, %v461
    %v463 = vsel %vm357, %v340, 0.0
    %v464 = vrot.slane %v463, 4
    %v465 = vadd.f32 %v463, %v464
    %v466 = vrot.slane %v465, 2
    %v467 = vadd.f32 %v465, %v466
    %v468 = vrot.slane %v467, 1
    %v469 = vadd.f32 %v467, %v468
    %v470 = vsel %vm357, %v341, 0.0
    %v471 = vrot.slane %v470, 4
    %v472 = vadd.f32 %v470, %v471
    %v473 = vrot.slane %v472, 2
    %v474 = vadd.f32 %v472, %v473
    %v475 = vrot.slane %v474, 1
    %v476 = vadd.f32 %v474, %v475
    %v477 = vsel %vm357, %v342, 0.0
    %v478 = vrot.slane %v477, 4
    %v479 = vadd.f32 %v477, %v478
    %v480 = vrot.slane %v479, 2
    %v481 = vadd.f32 %v479, %v480
    %v482 = vrot.slane %v481, 1
    %v483 = vadd.f32 %v481, %v482
    %v484 = vsel %vm357, %v343, 0.0
    %v485 = vrot.slane %v484, 4
    %v486 = vadd.f32 %v484, %v485
    %v487 = vrot.slane %v486, 2
    %v488 = vadd.f32 %v486, %v487
    %v489 = vrot.slane %v488, 1
    %v490 = vadd.f32 %v488, %v489
    %v491 = vsel %vm357, %v344, 0.0
    %v492 = vrot.slane %v491, 4
    %v493 = vadd.f32 %v491, %v492
    %v494 = vrot.slane %v493, 2
    %v495 = vadd.f32 %v493, %v494
    %v496 = vrot.slane %v495, 1
    %v497 = vadd.f32 %v495, %v496
    %v498 = vsel %vm357, %v345, 0.0
    %v499 = vrot.slane %v498, 4
    %v500 = vadd.f32 %v498, %v499
    %v501 = vrot.slane %v500, 2
    %v502 = vadd.f32 %v500, %v501
    %v503 = vrot.slane %v502, 1
    %v504 = vadd.f32 %v502, %v503
    %v505 = vsel %vm357, %v346, 0.0
    %v506 = vrot.slane %v505, 4
    %v507 = vadd.f32 %v505, %v506
    %v508 = vrot.slane %v507, 2
    %v509 = vadd.f32 %v507, %v508
    %v510 = vrot.slane %v509, 1
    %v511 = vadd.f32 %v509, %v510
    %v512 = vsel %vm357, %v347, 0.0
    %v513 = vrot.slane %v512, 4
    %v514 = vadd.f32 %v512, %v513
    %v515 = vrot.slane %v514, 2
    %v516 = vadd.f32 %v514, %v515
    %v517 = vrot.slane %v516, 1
    %v518 = vadd.f32 %v516, %v517
    %v519 = vsel %vm357, %v348, 0.0
    %v520 = vrot.slane %v519, 4
    %v521 = vadd.f32 %v519, %v520
    %v522 = vrot.slane %v521, 2
    %v523 = vadd.f32 %v521, %v522
    %v524 = vrot.slane %v523, 1
    %v525 = vadd.f32 %v523, %v524
    %v526 = vsel %vm357, %v349, 0.0
    %v527 = vrot.slane %v526, 4
    %v528 = vadd.f32 %v526, %v527
    %v529 = vrot.slane %v528, 2
    %v530 = vadd.f32 %v528, %v529
    %v531 = vrot.slane %v530, 1
    %v532 = vadd.f32 %v530, %v531
    %v533 = vsel %vm357, %v350, 0.0
    %v534 = vrot.slane %v533, 4
    %v535 = vadd.f32 %v533, %v534
    %v536 = vrot.slane %v535, 2
    %v537 = vadd.f32 %v535, %v536
    %v538 = vrot.slane %v537, 1
    %v539 = vadd.f32 %v537, %v538
    %v540 = vsel %vm357, %v351, 0.0
    %v541 = vrot.slane %v540, 4
    %v542 = vadd.f32 %v540, %v541
    %v543 = vrot.slane %v542, 2
    %v544 = vadd.f32 %v542, %v543
    %v545 = vrot.slane %v544, 1
    %v546 = vadd.f32 %v544, %v545
    %v547 = vsel %vm357, %v352, 0.0
    %v548 = vrot.slane %v547, 4
    %v549 = vadd.f32 %v547, %v548
    %v550 = vrot.slane %v549, 2
    %v551 = vadd.f32 %v549, %v550
    %v552 = vrot.slane %v551, 1
    %v553 = vadd.f32 %v551, %v552
    %v554 = vsel %vm357, %v353, 0.0
    %v555 = vrot.slane %v554, 4
    %v556 = vadd.f32 %v554, %v555
    %v557 = vrot.slane %v556, 2
    %v558 = vadd.f32 %v556, %v557
    %v559 = vrot.slane %v558, 1
    %v560 = vadd.f32 %v558, %v559
    %v561 = vsel %vm357, %v354, 0.0
    %v562 = vrot.slane %v561, 4
    %v563 = vadd.f32 %v561, %v562
    %v564 = vrot.slane %v563, 2
    %v565 = vadd.f32 %v563, %v564
    %v566 = vrot.slane %v565, 1
    %v567 = vadd.f32 %v565, %v566
    %v568 = vsel %vm357, %v355, 0.0
    %v569 = vrot.slane %v568, 4
    %v570 = vadd.f32 %v568, %v569
    %v571 = vrot.slane %v570, 2
    %v572 = vadd.f32 %v570, %v571
    %v573 = vrot.slane %v572, 1
    %v574 = vadd.f32 %v572, %v573
    %v575 = vsel %vm357, %v356, 0.0
    %v576 = vrot.slane %v575, 4
    %v577 = vadd.f32 %v575, %v576
    %v578 = vrot.slane %v577, 2
    %v579 = vadd.f32 %v577, %v578
    %v580 = vrot.slane %v579, 1
    %v581 = vadd.f32 %v579, %v580
    %vm582 = vcmask 64512
    %v583 = vsel %vm582, %v65, 0.0
    %584 = vadd.xlane.f32.xlu0 %v583
    %v585 = vpop.xlane.xlu0 %584
    %v586 = vsel %vm582, %v66, 0.0
    %587 = vadd.xlane.f32.xlu0 %v586
    %v588 = vpop.xlane.xlu0 %587
    %v589 = vsel %vm582, %v67, 0.0
    %590 = vadd.xlane.f32.xlu0 %v589
    %v591 = vpop.xlane.xlu0 %590
    %v592 = vsel %vm582, %v68, 0.0
    %593 = vadd.xlane.f32.xlu0 %v592
    %v594 = vpop.xlane.xlu0 %593
    %v595 = vld [vmem:[%s3] sm:$0xff]
    %v596 = vld [vmem:[%s3 + $0x8] sm:$0xff]
    %v597 = vld [vmem:[%s3 + $0x10] sm:$0xff]
    %v598 = vld [vmem:[%s3 + $0x18] sm:$0xff]
    %v599 = vld [vmem:[%s3 + $0x20] sm:$0x1]
    %v600 = vlaneseq
    %v601 = vshrl.u32 %v600, 7
    %v602 = vsub.s32 0, %v601
    %v603 = vrot.slane %v599, %v602
    %v604 = vmul.f32 %v585, %v603
    %v605 = vmul.f32 %v588, %v603
    %v606 = vmul.f32 %v591, %v603
    %v607 = vmul.f32 %v594, %v603
    %vm640 = vcmask 1041409
    %v641 = vsel %vm640, %v371, %v364
    %vm642 = vcmask 1042434
    %v643 = vsel %vm642, %v378, %v641
    %vm644 = vcmask 1043459
    %v645 = vsel %vm644, %v385, %v643
    %vm646 = vcmask 1044484
    %v647 = vsel %vm646, %v392, %v645
    %vm648 = vcmask 1045509
    %v649 = vsel %vm648, %v399, %v647
    %vm650 = vcmask 1046534
    %v651 = vsel %vm650, %v406, %v649
    %vm652 = vcmask 1047559
    %v653 = vsel %vm652, %v413, %v651
    %v654 = vsel %vm640, %v427, %v420
    %v655 = vsel %vm642, %v434, %v654
    %v656 = vsel %vm644, %v441, %v655
    %v657 = vsel %vm646, %v448, %v656
    %v658 = vsel %vm648, %v455, %v657
    %v659 = vsel %vm650, %v462, %v658
    %v660 = vsel %vm652, %v469, %v659
    %v661 = vsel %vm640, %v483, %v476
    %v662 = vsel %vm642, %v490, %v661
    %v663 = vsel %vm644, %v497, %v662
    %v664 = vsel %vm646, %v504, %v663
    %v665 = vsel %vm648, %v511, %v664
    %v666 = vsel %vm650, %v518, %v665
    %v667 = vsel %vm652, %v525, %v666
    %v668 = vsel %vm640, %v539, %v532
    %v669 = vsel %vm642, %v546, %v668
    %v670 = vsel %vm644, %v553, %v669
    %v671 = vsel %vm646, %v560, %v670
    %v672 = vsel %vm648, %v567, %v671
    %v673 = vsel %vm650, %v574, %v672
    %v674 = vsel %vm652, %v581, %v673
    %v675 = vsel %vm357, %v653, 0
    %v677 = vsel %vm357, %v660, 0
    %v679 = vsel %vm357, %v667, 0
    %v681 = vsel %vm357, %v674, 0
    %683 = vmatprep.subr.mxu0 0.0
    %684 = vmatpush1.msra.mxu0 0.0
    %685 = vmatprep.subr.mxu0 0.0
    %686 = vmatpush1.msra.mxu0 0.0
    %687 = vmatprep.subr.mxu0 0.0
    %688 = vmatpush1.msra.mxu0 0.0
    %689 = vmatprep.subr.mxu0 0.0
    %690 = vmatpush1.msra.mxu0 0.0
    %691 = vmatprep.subr.mxu0 0.0
    %692 = vmatpush1.msra.mxu0 0.0
    %693 = vmatprep.subr.mxu0 0.0
    %694 = vmatpush1.msra.mxu0 0.0
    %695 = vmatprep.subr.mxu0 0.0
    %696 = vmatpush1.msra.mxu0 0.0
    %697 = vmatprep.subr.mxu0 0.0
    %698 = vmatpush1.msra.mxu0 0.0
    %699 = vmatprep.subr.mxu0 0.0
    %700 = vmatpush1.msra.mxu0 0.0
    %701 = vmatprep.subr.mxu0 0.0
    %702 = vmatpush1.msra.mxu0 0.0
    %703 = vmatprep.subr.mxu0 0.0
    %704 = vmatpush1.msra.mxu0 0.0
    %705 = vmatprep.subr.mxu0 0.0
    %706 = vmatpush1.msra.mxu0 0.0
    %707 = vmatprep.subr.mxu0 0.0
    %708 = vmatpush1.msra.mxu0 %v598
    %709 = vmatprep.subr.mxu0 0.0
    %710 = vmatpush1.msra.mxu0 %v597
    %711 = vmatprep.subr.mxu0 0.0
    %712 = vmatpush1.msra.mxu0 %v596
    %713 = vmatprep.subr.mxu0 0.0
    %714 = vmatpush1.msra.mxu0 %v595
    %715 = vmatprep.subr.mxu0 0.0
    %716 = vmatpush2.msra.mxu0 0.0
    %717 = vmatprep.subr.mxu0 0.0
    %718 = vmatpush2.msra.mxu0 0.0
    %719 = vmatprep.subr.mxu0 0.0
    %720 = vmatpush2.msra.mxu0 0.0
    %721 = vmatprep.subr.mxu0 0.0
    %722 = vmatpush2.msra.mxu0 0.0
    %723 = vmatprep.subr.mxu0 0.0
    %724 = vmatpush2.msra.mxu0 0.0
    %725 = vmatprep.subr.mxu0 0.0
    %726 = vmatpush2.msra.mxu0 0.0
    %727 = vmatprep.subr.mxu0 0.0
    %728 = vmatpush2.msra.mxu0 0.0
    %729 = vmatprep.subr.mxu0 0.0
    %730 = vmatpush2.msra.mxu0 0.0
    %731 = vmatprep.subr.mxu0 0.0
    %732 = vmatpush2.msra.mxu0 0.0
    %733 = vmatprep.subr.mxu0 0.0
    %734 = vmatpush2.msra.mxu0 0.0
    %735 = vmatprep.subr.mxu0 0.0
    %736 = vmatpush2.msra.mxu0 0.0
    %737 = vmatprep.subr.mxu0 0.0
    %738 = vmatpush2.msra.mxu0 0.0
    %739 = vmatprep.subr.mxu0 0.0
    %740 = vmatpush2.msra.mxu0 0.0
    %741 = vmatprep.subr.mxu0 0.0
    %742 = vmatpush2.msra.mxu0 0.0
    %743 = vmatprep.subr.mxu0 0.0
    %744 = vmatpush2.msra.mxu0 0.0
    %745 = vmatprep.subr.mxu0 0.0
    %746 = vmatpush2.msra.mxu0 0.0
    %747 = vmatprep.mubr.f32.mxu0 0.0
    %748 = vmatmul.mubr.f32.gmra.mxu0 %v675
    %v749 = vpop.f32.mrf.mxu0
    %v750 = vadd.f32 %v604, %v749
    %v751 = vpop.f32.mrf.mxu0
    %752 = vmatprep.mubr.f32.mxu0 0.0
    %753 = vmatmul.mubr.f32.gmra.mxu0 %v677
    %v754 = vpop.f32.mrf.mxu0
    %v755 = vadd.f32 %v605, %v754
    %v756 = vpop.f32.mrf.mxu0
    %757 = vmatprep.mubr.f32.mxu0 0.0
    %758 = vmatmul.mubr.f32.gmra.mxu0 %v679
    %v759 = vpop.f32.mrf.mxu0
    %v760 = vadd.f32 %v606, %v759
    %v761 = vpop.f32.mrf.mxu0
    %762 = vmatprep.mubr.f32.mxu0 0.0
    %763 = vmatmul.mubr.f32.gmra.mxu0 %v681
    %v764 = vpop.f32.mrf.mxu0
    %v765 = vadd.f32 %v607, %v764
    %v766 = vpop.f32.mrf.mxu0
    %767 = vdwg.mxu0
    %770 = vrot.lane.b32.xlu0 %v760, 32
    %v771 = vpop.permute.xlu0 %770
    %772 = vrot.lane.b32.xlu0 %v765, 32
    %v773 = vpop.permute.xlu0 %772
    %v776 = vsel %vm357, %v750, %v771
    %v777 = vsel %vm357, %v755, %v773
    %v778 = vld [vmem:[#allocation5] sm:$0xff]
    %v779 = vld [vmem:[#allocation5 + $0x8] sm:$0xff]
    %v780 = vld [vmem:[#allocation5 + $0x10] sm:$0xff]
    %v781 = vld [vmem:[#allocation5 + $0x18] sm:$0xff]
    %v782 = vld [vmem:[#allocation5 + $0x20] sm:$0xff]
    %v783 = vld [vmem:[#allocation5 + $0x28] sm:$0xff]
    %v784 = vld [vmem:[#allocation5 + $0x30] sm:$0xff]
    %v785 = vld [vmem:[#allocation5 + $0x38] sm:$0xff]
    %v786 = vld [vmem:[#allocation5 + $0x80] sm:$0x1]
    %v787 = vlaneseq
    %v788 = vshrl.u32 %v787, 7
    %v789 = vsub.s32 0, %v788
    %v790 = vrot.slane %v786, %v789
    %vm791 = vcmask 523264
    %v793 = vsel %vm791, %v776, 0
    %v796 = vsel %vm791, %v777, 0
    %798 = vmatprep.subr.mxu0 0.0
    %799 = vmatpush1.msra.mxu0 0.0
    %800 = vmatprep.subr.mxu0 0.0
    %801 = vmatpush1.msra.mxu0 0.0
    %802 = vmatprep.subr.mxu0 0.0
    %803 = vmatpush1.msra.mxu0 0.0
    %804 = vmatprep.subr.mxu0 0.0
    %805 = vmatpush1.msra.mxu0 0.0
    %806 = vmatprep.subr.mxu0 0.0
    %807 = vmatpush1.msra.mxu0 0.0
    %808 = vmatprep.subr.mxu0 0.0
    %809 = vmatpush1.msra.mxu0 0.0
    %810 = vmatprep.subr.mxu0 0.0
    %811 = vmatpush1.msra.mxu0 0.0
    %812 = vmatprep.subr.mxu0 0.0
    %813 = vmatpush1.msra.mxu0 0.0
    %814 = vmatprep.subr.mxu0 0.0
    %815 = vmatpush1.msra.mxu0 %v785
    %816 = vmatprep.subr.mxu0 0.0
    %817 = vmatpush1.msra.mxu0 %v784
    %818 = vmatprep.subr.mxu0 0.0
    %819 = vmatpush1.msra.mxu0 %v783
    %820 = vmatprep.subr.mxu0 0.0
    %821 = vmatpush1.msra.mxu0 %v782
    %822 = vmatprep.subr.mxu0 0.0
    %823 = vmatpush1.msra.mxu0 %v781
    %824 = vmatprep.subr.mxu0 0.0
    %825 = vmatpush1.msra.mxu0 %v780
    %826 = vmatprep.subr.mxu0 0.0
    %827 = vmatpush1.msra.mxu0 %v779
    %828 = vmatprep.subr.mxu0 0.0
    %829 = vmatpush1.msra.mxu0 %v778
    %830 = vmatprep.subr.mxu0 0.0
    %831 = vmatpush2.msra.mxu0 0.0
    %832 = vmatprep.subr.mxu0 0.0
    %833 = vmatpush2.msra.mxu0 0.0
    %834 = vmatprep.subr.mxu0 0.0
    %835 = vmatpush2.msra.mxu0 0.0
    %836 = vmatprep.subr.mxu0 0.0
    %837 = vmatpush2.msra.mxu0 0.0
    %838 = vmatprep.subr.mxu0 0.0
    %839 = vmatpush2.msra.mxu0 0.0
    %840 = vmatprep.subr.mxu0 0.0
    %841 = vmatpush2.msra.mxu0 0.0
    %842 = vmatprep.subr.mxu0 0.0
    %843 = vmatpush2.msra.mxu0 0.0
    %844 = vmatprep.subr.mxu0 0.0
    %845 = vmatpush2.msra.mxu0 0.0
    %846 = vmatprep.subr.mxu0 0.0
    %847 = vmatpush2.msra.mxu0 0.0
    %848 = vmatprep.subr.mxu0 0.0
    %849 = vmatpush2.msra.mxu0 0.0
    %850 = vmatprep.subr.mxu0 0.0
    %851 = vmatpush2.msra.mxu0 0.0
    %852 = vmatprep.subr.mxu0 0.0
    %853 = vmatpush2.msra.mxu0 0.0
    %854 = vmatprep.subr.mxu0 0.0
    %855 = vmatpush2.msra.mxu0 0.0
    %856 = vmatprep.subr.mxu0 0.0
    %857 = vmatpush2.msra.mxu0 0.0
    %858 = vmatprep.subr.mxu0 0.0
    %859 = vmatpush2.msra.mxu0 0.0
    %860 = vmatprep.subr.mxu0 0.0
    %861 = vmatpush2.msra.mxu0 0.0
    %862 = vmatprep.mubr.f32.mxu0 0.0
    %863 = vmatmul.mubr.f32.gmra.mxu0 %v793
    %v864 = vpop.f32.mrf.mxu0
    %v865 = vadd.f32 %v790, %v864
    %v866 = vpop.f32.mrf.mxu0
    %867 = vmatprep.mubr.f32.mxu0 0.0
    %868 = vmatmul.mubr.f32.gmra.mxu0 %v796
    %v869 = vpop.f32.mrf.mxu0
    %v870 = vadd.f32 %v790, %v869
    %v871 = vpop.f32.mrf.mxu0
    %872 = vdwg.mxu0
    %v873 = vld [vmem:[#allocation5 + $0x40] sm:$0xff]
    %v874 = vld [vmem:[#allocation5 + $0x48] sm:$0xff]
    %v875 = vld [vmem:[#allocation5 + $0x50] sm:$0xff]
    %v876 = vld [vmem:[#allocation5 + $0x58] sm:$0xff]
    %v877 = vld [vmem:[#allocation5 + $0x60] sm:$0xff]
    %v878 = vld [vmem:[#allocation5 + $0x68] sm:$0xff]
    %v879 = vld [vmem:[#allocation5 + $0x70] sm:$0xff]
    %v880 = vld [vmem:[#allocation5 + $0x78] sm:$0xff]
    %v882 = vsel %vm357, 0.0, 0
    %884 = vmatprep.subr.mxu0 0.0
    %885 = vmatpush1.msra.mxu0 0.0
    %886 = vmatprep.subr.mxu0 0.0
    %887 = vmatpush1.msra.mxu0 0.0
    %888 = vmatprep.subr.mxu0 0.0
    %889 = vmatpush1.msra.mxu0 0.0
    %890 = vmatprep.subr.mxu0 0.0
    %891 = vmatpush1.msra.mxu0 0.0
    %892 = vmatprep.subr.mxu0 0.0
    %893 = vmatpush1.msra.mxu0 0.0
    %894 = vmatprep.subr.mxu0 0.0
    %895 = vmatpush1.msra.mxu0 0.0
    %896 = vmatprep.subr.mxu0 0.0
    %897 = vmatpush1.msra.mxu0 0.0
    %898 = vmatprep.subr.mxu0 0.0
    %899 = vmatpush1.msra.mxu0 0.0
    %900 = vmatprep.subr.mxu0 0.0
    %901 = vmatpush1.msra.mxu0 0.0
    %902 = vmatprep.subr.mxu0 0.0
    %903 = vmatpush1.msra.mxu0 0.0
    %904 = vmatprep.subr.mxu0 0.0
    %905 = vmatpush1.msra.mxu0 0.0
    %906 = vmatprep.subr.mxu0 0.0
    %907 = vmatpush1.msra.mxu0 0.0
    %908 = vmatprep.subr.mxu0 0.0
    %909 = vmatpush1.msra.mxu0 %v876
    %910 = vmatprep.subr.mxu0 0.0
    %911 = vmatpush1.msra.mxu0 %v875
    %912 = vmatprep.subr.mxu0 0.0
    %913 = vmatpush1.msra.mxu0 %v874
    %914 = vmatprep.subr.mxu0 0.0
    %915 = vmatpush1.msra.mxu0 %v873
    %916 = vmatprep.subr.mxu0 0.0
    %917 = vmatpush2.msra.mxu0 0.0
    %918 = vmatprep.subr.mxu0 0.0
    %919 = vmatpush2.msra.mxu0 0.0
    %920 = vmatprep.subr.mxu0 0.0
    %921 = vmatpush2.msra.mxu0 0.0
    %922 = vmatprep.subr.mxu0 0.0
    %923 = vmatpush2.msra.mxu0 0.0
    %924 = vmatprep.subr.mxu0 0.0
    %925 = vmatpush2.msra.mxu0 0.0
    %926 = vmatprep.subr.mxu0 0.0
    %927 = vmatpush2.msra.mxu0 0.0
    %928 = vmatprep.subr.mxu0 0.0
    %929 = vmatpush2.msra.mxu0 0.0
    %930 = vmatprep.subr.mxu0 0.0
    %931 = vmatpush2.msra.mxu0 0.0
    %932 = vmatprep.subr.mxu0 0.0
    %933 = vmatpush2.msra.mxu0 0.0
    %934 = vmatprep.subr.mxu0 0.0
    %935 = vmatpush2.msra.mxu0 0.0
    %936 = vmatprep.subr.mxu0 0.0
    %937 = vmatpush2.msra.mxu0 0.0
    %938 = vmatprep.subr.mxu0 0.0
    %939 = vmatpush2.msra.mxu0 0.0
    %940 = vmatprep.subr.mxu0 0.0
    %941 = vmatpush2.msra.mxu0 0.0
    %942 = vmatprep.subr.mxu0 0.0
    %943 = vmatpush2.msra.mxu0 0.0
    %944 = vmatprep.subr.mxu0 0.0
    %945 = vmatpush2.msra.mxu0 0.0
    %946 = vmatprep.subr.mxu0 0.0
    %947 = vmatpush2.msra.mxu0 0.0
    %948 = vmatprep.mubr.f32.mxu0 0.0
    %949 = vmatmul.mubr.f32.gmra.mxu0 %v882
    %v950 = vpop.f32.mrf.mxu0
    %v951 = vadd.f32 0.0, %v950
    %v952 = vpop.f32.mrf.mxu0
    %953 = vmatprep.mubr.f32.mxu0 0.0
    %954 = vmatmul.mubr.f32.gmra.mxu0 %v882
    %v955 = vpop.f32.mrf.mxu0
    %v956 = vadd.f32 0.0, %v955
    %v957 = vpop.f32.mrf.mxu0
    %958 = vdwg.mxu0
    %959 = vmatprep.subr.mxu0 0.0
    %960 = vmatpush1.msra.mxu0 0.0
    %961 = vmatprep.subr.mxu0 0.0
    %962 = vmatpush1.msra.mxu0 0.0
    %963 = vmatprep.subr.mxu0 0.0
    %964 = vmatpush1.msra.mxu0 0.0
    %965 = vmatprep.subr.mxu0 0.0
    %966 = vmatpush1.msra.mxu0 0.0
    %967 = vmatprep.subr.mxu0 0.0
    %968 = vmatpush1.msra.mxu0 0.0
    %969 = vmatprep.subr.mxu0 0.0
    %970 = vmatpush1.msra.mxu0 0.0
    %971 = vmatprep.subr.mxu0 0.0
    %972 = vmatpush1.msra.mxu0 0.0
    %973 = vmatprep.subr.mxu0 0.0
    %974 = vmatpush1.msra.mxu0 0.0
    %975 = vmatprep.subr.mxu0 0.0
    %976 = vmatpush1.msra.mxu0 0.0
    %977 = vmatprep.subr.mxu0 0.0
    %978 = vmatpush1.msra.mxu0 0.0
    %979 = vmatprep.subr.mxu0 0.0
    %980 = vmatpush1.msra.mxu0 0.0
    %981 = vmatprep.subr.mxu0 0.0
    %982 = vmatpush1.msra.mxu0 0.0
    %983 = vmatprep.subr.mxu0 0.0
    %984 = vmatpush1.msra.mxu0 %v880
    %985 = vmatprep.subr.mxu0 0.0
    %986 = vmatpush1.msra.mxu0 %v879
    %987 = vmatprep.subr.mxu0 0.0
    %988 = vmatpush1.msra.mxu0 %v878
    %989 = vmatprep.subr.mxu0 0.0
    %990 = vmatpush1.msra.mxu0 %v877
    %991 = vmatprep.subr.mxu0 0.0
    %992 = vmatpush2.msra.mxu0 0.0
    %993 = vmatprep.subr.mxu0 0.0
    %994 = vmatpush2.msra.mxu0 0.0
    %995 = vmatprep.subr.mxu0 0.0
    %996 = vmatpush2.msra.mxu0 0.0
    %997 = vmatprep.subr.mxu0 0.0
    %998 = vmatpush2.msra.mxu0 0.0
    %999 = vmatprep.subr.mxu0 0.0
    %1000 = vmatpush2.msra.mxu0 0.0
    %1001 = vmatprep.subr.mxu0 0.0
    %1002 = vmatpush2.msra.mxu0 0.0
    %1003 = vmatprep.subr.mxu0 0.0
    %1004 = vmatpush2.msra.mxu0 0.0
    %1005 = vmatprep.subr.mxu0 0.0
    %1006 = vmatpush2.msra.mxu0 0.0
    %1007 = vmatprep.subr.mxu0 0.0
    %1008 = vmatpush2.msra.mxu0 0.0
    %1009 = vmatprep.subr.mxu0 0.0
    %1010 = vmatpush2.msra.mxu0 0.0
    %1011 = vmatprep.subr.mxu0 0.0
    %1012 = vmatpush2.msra.mxu0 0.0
    %1013 = vmatprep.subr.mxu0 0.0
    %1014 = vmatpush2.msra.mxu0 0.0
    %1015 = vmatprep.subr.mxu0 0.0
    %1016 = vmatpush2.msra.mxu0 0.0
    %1017 = vmatprep.subr.mxu0 0.0
    %1018 = vmatpush2.msra.mxu0 0.0
    %1019 = vmatprep.subr.mxu0 0.0
    %1020 = vmatpush2.msra.mxu0 0.0
    %1021 = vmatprep.subr.mxu0 0.0
    %1022 = vmatpush2.msra.mxu0 0.0
    %1023 = vmatprep.mubr.f32.mxu0 0.0
    %1024 = vmatmul.mubr.f32.gmra.mxu0 %v882
    %v1025 = vpop.f32.mrf.mxu0
    %v1026 = vadd.f32 0.0, %v1025
    %v1027 = vpop.f32.mrf.mxu0
    %1028 = vmatprep.mubr.f32.mxu0 0.0
    %1029 = vmatmul.mubr.f32.gmra.mxu0 %v882
    %v1030 = vpop.f32.mrf.mxu0
    %v1031 = vadd.f32 0.0, %v1030
    %v1032 = vpop.f32.mrf.mxu0
    %1033 = vdwg.mxu0
    %v1035 = vsel %vm582, %v67, 0
    %1037 = vmatprep.subr.mxu0 0.0
    %1038 = vmatpush1.msra.mxu0 0.0
    %1039 = vmatprep.subr.mxu0 0.0
    %1040 = vmatpush1.msra.mxu0 0.0
    %1041 = vmatprep.subr.mxu0 0.0
    %1042 = vmatpush1.msra.mxu0 0.0
    %1043 = vmatprep.subr.mxu0 0.0
    %1044 = vmatpush1.msra.mxu0 0.0
    %1045 = vmatprep.subr.mxu0 0.0
    %1046 = vmatpush1.msra.mxu0 0.0
    %1047 = vmatprep.subr.mxu0 0.0
    %1048 = vmatpush1.msra.mxu0 0.0
    %1049 = vmatprep.subr.mxu0 0.0
    %1050 = vmatpush1.msra.mxu0 0.0
    %1051 = vmatprep.subr.mxu0 0.0
    %1052 = vmatpush1.msra.mxu0 0.0
    %1053 = vmatprep.subr.mxu0 0.0
    %1054 = vmatpush1.msra.mxu0 0.0
    %1055 = vmatprep.subr.mxu0 0.0
    %1056 = vmatpush1.msra.mxu0 0.0
    %1057 = vmatprep.subr.mxu0 0.0
    %1058 = vmatpush1.msra.mxu0 0.0
    %1059 = vmatprep.subr.mxu0 0.0
    %1060 = vmatpush1.msra.mxu0 0.0
    %1061 = vmatprep.subr.mxu0 0.0
    %1062 = vmatpush1.msra.mxu0 0.0
    %1063 = vmatprep.subr.mxu0 0.0
    %1064 = vmatpush1.msra.mxu0 0.0
    %1065 = vmatprep.subr.mxu0 0.0
    %1066 = vmatpush1.msra.mxu0 0.0
    %1067 = vmatprep.subr.mxu0 0.0
    %1068 = vmatpush1.msra.mxu0 %v1026
    %1069 = vmatprep.subr.mxu0 0.0
    %1070 = vmatpush2.msra.mxu0 0.0
    %1071 = vmatprep.subr.mxu0 0.0
    %1072 = vmatpush2.msra.mxu0 0.0
    %1073 = vmatprep.subr.mxu0 0.0
    %1074 = vmatpush2.msra.mxu0 0.0
    %1075 = vmatprep.subr.mxu0 0.0
    %1076 = vmatpush2.msra.mxu0 0.0
    %1077 = vmatprep.subr.mxu0 0.0
    %1078 = vmatpush2.msra.mxu0 0.0
    %1079 = vmatprep.subr.mxu0 0.0
    %1080 = vmatpush2.msra.mxu0 0.0
    %1081 = vmatprep.subr.mxu0 0.0
    %1082 = vmatpush2.msra.mxu0 0.0
    %1083 = vmatprep.subr.mxu0 0.0
    %1084 = vmatpush2.msra.mxu0 0.0
    %1085 = vmatprep.subr.mxu0 0.0
    %1086 = vmatpush2.msra.mxu0 0.0
    %1087 = vmatprep.subr.mxu0 0.0
    %1088 = vmatpush2.msra.mxu0 0.0
    %1089 = vmatprep.subr.mxu0 0.0
    %1090 = vmatpush2.msra.mxu0 0.0
    %1091 = vmatprep.subr.mxu0 0.0
    %1092 = vmatpush2.msra.mxu0 0.0
    %1093 = vmatprep.subr.mxu0 0.0
    %1094 = vmatpush2.msra.mxu0 0.0
    %1095 = vmatprep.subr.mxu0 0.0
    %1096 = vmatpush2.msra.mxu0 0.0
    %1097 = vmatprep.subr.mxu0 0.0
    %1098 = vmatpush2.msra.mxu0 0.0
    %1099 = vmatprep.subr.mxu0 0.0
    %1100 = vmatpush2.msra.mxu0 0.0
    %1101 = vmatprep.mubr.f32.mxu0 0.0
    %1102 = vmatmul.mubr.f32.gmra.mxu0 %v1035
    %v1103 = vpop.f32.mrf.mxu0
    %v1104 = vadd.f32 0.0, %v1103
    %v1105 = vpop.f32.mrf.mxu0
    %1106 = vdwg.mxu0
    %v1108 = vsel %vm582, %v68, 0
    %1110 = vmatprep.subr.mxu0 0.0
    %1111 = vmatpush1.msra.mxu0 0.0
    %1112 = vmatprep.subr.mxu0 0.0
    %1113 = vmatpush1.msra.mxu0 0.0
    %1114 = vmatprep.subr.mxu0 0.0
    %1115 = vmatpush1.msra.mxu0 0.0
    %1116 = vmatprep.subr.mxu0 0.0
    %1117 = vmatpush1.msra.mxu0 0.0
    %1118 = vmatprep.subr.mxu0 0.0
    %1119 = vmatpush1.msra.mxu0 0.0
    %1120 = vmatprep.subr.mxu0 0.0
    %1121 = vmatpush1.msra.mxu0 0.0
    %1122 = vmatprep.subr.mxu0 0.0
    %1123 = vmatpush1.msra.mxu0 0.0
    %1124 = vmatprep.subr.mxu0 0.0
    %1125 = vmatpush1.msra.mxu0 0.0
    %1126 = vmatprep.subr.mxu0 0.0
    %1127 = vmatpush1.msra.mxu0 0.0
    %1128 = vmatprep.subr.mxu0 0.0
    %1129 = vmatpush1.msra.mxu0 0.0
    %1130 = vmatprep.subr.mxu0 0.0
    %1131 = vmatpush1.msra.mxu0 0.0
    %1132 = vmatprep.subr.mxu0 0.0
    %1133 = vmatpush1.msra.mxu0 0.0
    %1134 = vmatprep.subr.mxu0 0.0
    %1135 = vmatpush1.msra.mxu0 0.0
    %1136 = vmatprep.subr.mxu0 0.0
    %1137 = vmatpush1.msra.mxu0 0.0
    %1138 = vmatprep.subr.mxu0 0.0
    %1139 = vmatpush1.msra.mxu0 0.0
    %1140 = vmatprep.subr.mxu0 0.0
    %1141 = vmatpush1.msra.mxu0 %v1031
    %1142 = vmatprep.subr.mxu0 0.0
    %1143 = vmatpush2.msra.mxu0 0.0
    %1144 = vmatprep.subr.mxu0 0.0
    %1145 = vmatpush2.msra.mxu0 0.0
    %1146 = vmatprep.subr.mxu0 0.0
    %1147 = vmatpush2.msra.mxu0 0.0
    %1148 = vmatprep.subr.mxu0 0.0
    %1149 = vmatpush2.msra.mxu0 0.0
    %1150 = vmatprep.subr.mxu0 0.0
    %1151 = vmatpush2.msra.mxu0 0.0
    %1152 = vmatprep.subr.mxu0 0.0
    %1153 = vmatpush2.msra.mxu0 0.0
    %1154 = vmatprep.subr.mxu0 0.0
    %1155 = vmatpush2.msra.mxu0 0.0
    %1156 = vmatprep.subr.mxu0 0.0
    %1157 = vmatpush2.msra.mxu0 0.0
    %1158 = vmatprep.subr.mxu0 0.0
    %1159 = vmatpush2.msra.mxu0 0.0
    %1160 = vmatprep.subr.mxu0 0.0
    %1161 = vmatpush2.msra.mxu0 0.0
    %1162 = vmatprep.subr.mxu0 0.0
    %1163 = vmatpush2.msra.mxu0 0.0
    %1164 = vmatprep.subr.mxu0 0.0
    %1165 = vmatpush2.msra.mxu0 0.0
    %1166 = vmatprep.subr.mxu0 0.0
    %1167 = vmatpush2.msra.mxu0 0.0
    %1168 = vmatprep.subr.mxu0 0.0
    %1169 = vmatpush2.msra.mxu0 0.0
    %1170 = vmatprep.subr.mxu0 0.0
    %1171 = vmatpush2.msra.mxu0 0.0
    %1172 = vmatprep.subr.mxu0 0.0
    %1173 = vmatpush2.msra.mxu0 0.0
    %1174 = vmatprep.mubr.f32.mxu0 0.0
    %1175 = vmatmul.mubr.f32.gmra.mxu0 %v1108
    %v1176 = vpop.f32.mrf.mxu0
    %v1177 = vadd.f32 0.0, %v1176
    %v1178 = vpop.f32.mrf.mxu0
    %1179 = vdwg.mxu0
    %v1181 = vsel %vm582, %v65, 0
    %1183 = vmatprep.subr.mxu0 0.0
    %1184 = vmatpush1.msra.mxu0 0.0
    %1185 = vmatprep.subr.mxu0 0.0
    %1186 = vmatpush1.msra.mxu0 0.0
    %1187 = vmatprep.subr.mxu0 0.0
    %1188 = vmatpush1.msra.mxu0 0.0
    %1189 = vmatprep.subr.mxu0 0.0
    %1190 = vmatpush1.msra.mxu0 0.0
    %1191 = vmatprep.subr.mxu0 0.0
    %1192 = vmatpush1.msra.mxu0 0.0
    %1193 = vmatprep.subr.mxu0 0.0
    %1194 = vmatpush1.msra.mxu0 0.0
    %1195 = vmatprep.subr.mxu0 0.0
    %1196 = vmatpush1.msra.mxu0 0.0
    %1197 = vmatprep.subr.mxu0 0.0
    %1198 = vmatpush1.msra.mxu0 0.0
    %1199 = vmatprep.subr.mxu0 0.0
    %1200 = vmatpush1.msra.mxu0 0.0
    %1201 = vmatprep.subr.mxu0 0.0
    %1202 = vmatpush1.msra.mxu0 0.0
    %1203 = vmatprep.subr.mxu0 0.0
    %1204 = vmatpush1.msra.mxu0 0.0
    %1205 = vmatprep.subr.mxu0 0.0
    %1206 = vmatpush1.msra.mxu0 0.0
    %1207 = vmatprep.subr.mxu0 0.0
    %1208 = vmatpush1.msra.mxu0 0.0
    %1209 = vmatprep.subr.mxu0 0.0
    %1210 = vmatpush1.msra.mxu0 0.0
    %1211 = vmatprep.subr.mxu0 0.0
    %1212 = vmatpush1.msra.mxu0 0.0
    %1213 = vmatprep.subr.mxu0 0.0
    %1214 = vmatpush1.msra.mxu0 %v951
    %1215 = vmatprep.subr.mxu0 0.0
    %1216 = vmatpush2.msra.mxu0 0.0
    %1217 = vmatprep.subr.mxu0 0.0
    %1218 = vmatpush2.msra.mxu0 0.0
    %1219 = vmatprep.subr.mxu0 0.0
    %1220 = vmatpush2.msra.mxu0 0.0
    %1221 = vmatprep.subr.mxu0 0.0
    %1222 = vmatpush2.msra.mxu0 0.0
    %1223 = vmatprep.subr.mxu0 0.0
    %1224 = vmatpush2.msra.mxu0 0.0
    %1225 = vmatprep.subr.mxu0 0.0
    %1226 = vmatpush2.msra.mxu0 0.0
    %1227 = vmatprep.subr.mxu0 0.0
    %1228 = vmatpush2.msra.mxu0 0.0
    %1229 = vmatprep.subr.mxu0 0.0
    %1230 = vmatpush2.msra.mxu0 0.0
    %1231 = vmatprep.subr.mxu0 0.0
    %1232 = vmatpush2.msra.mxu0 0.0
    %1233 = vmatprep.subr.mxu0 0.0
    %1234 = vmatpush2.msra.mxu0 0.0
    %1235 = vmatprep.subr.mxu0 0.0
    %1236 = vmatpush2.msra.mxu0 0.0
    %1237 = vmatprep.subr.mxu0 0.0
    %1238 = vmatpush2.msra.mxu0 0.0
    %1239 = vmatprep.subr.mxu0 0.0
    %1240 = vmatpush2.msra.mxu0 0.0
    %1241 = vmatprep.subr.mxu0 0.0
    %1242 = vmatpush2.msra.mxu0 0.0
    %1243 = vmatprep.subr.mxu0 0.0
    %1244 = vmatpush2.msra.mxu0 0.0
    %1245 = vmatprep.subr.mxu0 0.0
    %1246 = vmatpush2.msra.mxu0 0.0
    %1247 = vmatprep.mubr.f32.mxu0 0.0
    %1248 = vmatmul.mubr.f32.gmra.mxu0 %v1181
    %v1249 = vpop.f32.mrf.mxu0
    %v1250 = vadd.f32 %v1104, %v1249
    %v1251 = vpop.f32.mrf.mxu0
    %1252 = vdwg.mxu0
    %v1254 = vsel %vm582, %v66, 0
    %1256 = vmatprep.subr.mxu0 0.0
    %1257 = vmatpush1.msra.mxu0 0.0
    %1258 = vmatprep.subr.mxu0 0.0
    %1259 = vmatpush1.msra.mxu0 0.0
    %1260 = vmatprep.subr.mxu0 0.0
    %1261 = vmatpush1.msra.mxu0 0.0
    %1262 = vmatprep.subr.mxu0 0.0
    %1263 = vmatpush1.msra.mxu0 0.0
    %1264 = vmatprep.subr.mxu0 0.0
    %1265 = vmatpush1.msra.mxu0 0.0
    %1266 = vmatprep.subr.mxu0 0.0
    %1267 = vmatpush1.msra.mxu0 0.0
    %1268 = vmatprep.subr.mxu0 0.0
    %1269 = vmatpush1.msra.mxu0 0.0
    %1270 = vmatprep.subr.mxu0 0.0
    %1271 = vmatpush1.msra.mxu0 0.0
    %1272 = vmatprep.subr.mxu0 0.0
    %1273 = vmatpush1.msra.mxu0 0.0
    %1274 = vmatprep.subr.mxu0 0.0
    %1275 = vmatpush1.msra.mxu0 0.0
    %1276 = vmatprep.subr.mxu0 0.0
    %1277 = vmatpush1.msra.mxu0 0.0
    %1278 = vmatprep.subr.mxu0 0.0
    %1279 = vmatpush1.msra.mxu0 0.0
    %1280 = vmatprep.subr.mxu0 0.0
    %1281 = vmatpush1.msra.mxu0 0.0
    %1282 = vmatprep.subr.mxu0 0.0
    %1283 = vmatpush1.msra.mxu0 0.0
    %1284 = vmatprep.subr.mxu0 0.0
    %1285 = vmatpush1.msra.mxu0 0.0
    %1286 = vmatprep.subr.mxu0 0.0
    %1287 = vmatpush1.msra.mxu0 %v956
    %1288 = vmatprep.subr.mxu0 0.0
    %1289 = vmatpush2.msra.mxu0 0.0
    %1290 = vmatprep.subr.mxu0 0.0
    %1291 = vmatpush2.msra.mxu0 0.0
    %1292 = vmatprep.subr.mxu0 0.0
    %1293 = vmatpush2.msra.mxu0 0.0
    %1294 = vmatprep.subr.mxu0 0.0
    %1295 = vmatpush2.msra.mxu0 0.0
    %1296 = vmatprep.subr.mxu0 0.0
    %1297 = vmatpush2.msra.mxu0 0.0
    %1298 = vmatprep.subr.mxu0 0.0
    %1299 = vmatpush2.msra.mxu0 0.0
    %1300 = vmatprep.subr.mxu0 0.0
    %1301 = vmatpush2.msra.mxu0 0.0
    %1302 = vmatprep.subr.mxu0 0.0
    %1303 = vmatpush2.msra.mxu0 0.0
    %1304 = vmatprep.subr.mxu0 0.0
    %1305 = vmatpush2.msra.mxu0 0.0
    %1306 = vmatprep.subr.mxu0 0.0
    %1307 = vmatpush2.msra.mxu0 0.0
    %1308 = vmatprep.subr.mxu0 0.0
    %1309 = vmatpush2.msra.mxu0 0.0
    %1310 = vmatprep.subr.mxu0 0.0
    %1311 = vmatpush2.msra.mxu0 0.0
    %1312 = vmatprep.subr.mxu0 0.0
    %1313 = vmatpush2.msra.mxu0 0.0
    %1314 = vmatprep.subr.mxu0 0.0
    %1315 = vmatpush2.msra.mxu0 0.0
    %1316 = vmatprep.subr.mxu0 0.0
    %1317 = vmatpush2.msra.mxu0 0.0
    %1318 = vmatprep.subr.mxu0 0.0
    %1319 = vmatpush2.msra.mxu0 0.0
    %1320 = vmatprep.mubr.f32.mxu0 0.0
    %1321 = vmatmul.mubr.f32.gmra.mxu0 %v1254
    %v1322 = vpop.f32.mrf.mxu0
    %v1323 = vadd.f32 %v1177, %v1322
    %v1324 = vpop.f32.mrf.mxu0
    %1325 = vdwg.mxu0
    %v1326 = vadd.f32 %v865, %v1250
    %v1327 = vadd.f32 %v870, %v1323
    %v1328 = vxor.u32 %v1326, 2147483648
    %v1329 = vxor.u32 %v1327, 2147483648
    %v1330 = vmul.f32 %v1328, 1.442695
    %v1331 = vpow.pop %v1330
    %v1332 = vmul.f32 %v1329, 1.442695
    %v1333 = vpow.pop %v1332
    %v1334 = vadd.f32 %v1331, 1.0
    %v1335 = vadd.f32 %v1333, 1.0
    %v1336 = vrcp.pop %v1334
    %v1337 = vmul.f32 1.0, %v1336
    %v1338 = vrcp.pop %v1335
    %v1339 = vmul.f32 1.0, %v1338
    %v1340 = vmul.f32 %v1337, 0.0
    %v1341 = vmul.f32 %v1339, 0.0
    %1344 = vrot.lane.b32.xlu0 %v1337, 32
    %v1345 = vpop.permute.xlu0 %1344
    %1346 = vrot.lane.b32.xlu0 %v1339, 32
    %v1347 = vpop.permute.xlu0 %1346
    %v1350 = vmul.f32 %v1337, %v1345
    %v1351 = vmul.f32 %v1339, %v1347
    %1354 = vrot.lane.b32.xlu0 %v1350, 64
    %v1355 = vpop.permute.xlu0 %1354
    %1356 = vrot.lane.b32.xlu0 %v1351, 64
    %v1357 = vpop.permute.xlu0 %1356
    %v1360 = vadd.f32 %v1340, %v1355
    %v1361 = vadd.f32 %v1341, %v1357
    %v1362 = vtanh.pop %v1360
    %v1363 = vtanh.pop %v1361
    %1366 = vrot.lane.b32.xlu0 %v1362, 96
    %v1367 = vpop.permute.xlu0 %1366
    %1368 = vrot.lane.b32.xlu0 %v1363, 96
    %v1369 = vpop.permute.xlu0 %1368
    %v1372 = vmul.f32 %v1337, %v1367
    %v1373 = vmul.f32 %v1339, %v1369
    %1376 = vrot.lane.b32.xlu0 %v1372, 96
    %v1377 = vpop.permute.xlu0 %1376
    %1378 = vrot.lane.b32.xlu0 %v1373, 96
    %v1379 = vpop.permute.xlu0 %1378
    %v1380 = vsel %vm357, %v1377, 0
    %v1382 = vsel %vm357, %v1379, 0
    %1384 = vmatprep.subr.mxu0 0.0
    %1385 = vmatpush1.msra.mxu0 0.0
    %1386 = vmatprep.subr.mxu0 0.0
    %1387 = vmatpush1.msra.mxu0 0.0
    %1388 = vmatprep.subr.mxu0 0.0
    %1389 = vmatpush1.msra.mxu0 0.0
    %1390 = vmatprep.subr.mxu0 0.0
    %1391 = vmatpush1.msra.mxu0 0.0
    %1392 = vmatprep.subr.mxu0 0.0
    %1393 = vmatpush1.msra.mxu0 0.0
    %1394 = vmatprep.subr.mxu0 0.0
    %1395 = vmatpush1.msra.mxu0 0.0
    %1396 = vmatprep.subr.mxu0 0.0
    %1397 = vmatpush1.msra.mxu0 0.0
    %1398 = vmatprep.subr.mxu0 0.0
    %1399 = vmatpush1.msra.mxu0 0.0
    %1400 = vmatprep.subr.mxu0 0.0
    %1401 = vmatpush1.msra.mxu0 0.0
    %1402 = vmatprep.subr.mxu0 0.0
    %1403 = vmatpush1.msra.mxu0 0.0
    %1404 = vmatprep.subr.mxu0 0.0
    %1405 = vmatpush1.msra.mxu0 0.0
    %1406 = vmatprep.subr.mxu0 0.0
    %1407 = vmatpush1.msra.mxu0 0.0
    %1408 = vmatprep.subr.mxu0 0.0
    %1409 = vmatpush1.msra.mxu0 %v876
    %1410 = vmatprep.subr.mxu0 0.0
    %1411 = vmatpush1.msra.mxu0 %v875
    %1412 = vmatprep.subr.mxu0 0.0
    %1413 = vmatpush1.msra.mxu0 %v874
    %1414 = vmatprep.subr.mxu0 0.0
    %1415 = vmatpush1.msra.mxu0 %v873
    %1416 = vmatprep.subr.mxu0 0.0
    %1417 = vmatpush2.msra.mxu0 0.0
    %1418 = vmatprep.subr.mxu0 0.0
    %1419 = vmatpush2.msra.mxu0 0.0
    %1420 = vmatprep.subr.mxu0 0.0
    %1421 = vmatpush2.msra.mxu0 0.0
    %1422 = vmatprep.subr.mxu0 0.0
    %1423 = vmatpush2.msra.mxu0 0.0
    %1424 = vmatprep.subr.mxu0 0.0
    %1425 = vmatpush2.msra.mxu0 0.0
    %1426 = vmatprep.subr.mxu0 0.0
    %1427 = vmatpush2.msra.mxu0 0.0
    %1428 = vmatprep.subr.mxu0 0.0
    %1429 = vmatpush2.msra.mxu0 0.0
    %1430 = vmatprep.subr.mxu0 0.0
    %1431 = vmatpush2.msra.mxu0 0.0
    %1432 = vmatprep.subr.mxu0 0.0
    %1433 = vmatpush2.msra.mxu0 0.0
    %1434 = vmatprep.subr.mxu0 0.0
    %1435 = vmatpush2.msra.mxu0 0.0
    %1436 = vmatprep.subr.mxu0 0.0
    %1437 = vmatpush2.msra.mxu0 0.0
    %1438 = vmatprep.subr.mxu0 0.0
    %1439 = vmatpush2.msra.mxu0 0.0
    %1440 = vmatprep.subr.mxu0 0.0
    %1441 = vmatpush2.msra.mxu0 0.0
    %1442 = vmatprep.subr.mxu0 0.0
    %1443 = vmatpush2.msra.mxu0 0.0
    %1444 = vmatprep.subr.mxu0 0.0
    %1445 = vmatpush2.msra.mxu0 0.0
    %1446 = vmatprep.subr.mxu0 0.0
    %1447 = vmatpush2.msra.mxu0 0.0
    %1448 = vmatprep.mubr.f32.mxu0 0.0
    %1449 = vmatmul.mubr.f32.gmra.mxu0 %v1380
    %v1450 = vpop.f32.mrf.mxu0
    %v1451 = vadd.f32 0.0, %v1450
    %v1452 = vpop.f32.mrf.mxu0
    %1453 = vmatprep.mubr.f32.mxu0 0.0
    %1454 = vmatmul.mubr.f32.gmra.mxu0 %v1382
    %v1455 = vpop.f32.mrf.mxu0
    %v1456 = vadd.f32 0.0, %v1455
    %v1457 = vpop.f32.mrf.mxu0
    %1458 = vdwg.mxu0
    %1459 = vmatprep.subr.mxu0 0.0
    %1460 = vmatpush1.msra.mxu0 0.0
    %1461 = vmatprep.subr.mxu0 0.0
    %1462 = vmatpush1.msra.mxu0 0.0
    %1463 = vmatprep.subr.mxu0 0.0
    %1464 = vmatpush1.msra.mxu0 0.0
    %1465 = vmatprep.subr.mxu0 0.0
    %1466 = vmatpush1.msra.mxu0 0.0
    %1467 = vmatprep.subr.mxu0 0.0
    %1468 = vmatpush1.msra.mxu0 0.0
    %1469 = vmatprep.subr.mxu0 0.0
    %1470 = vmatpush1.msra.mxu0 0.0
    %1471 = vmatprep.subr.mxu0 0.0
    %1472 = vmatpush1.msra.mxu0 0.0
    %1473 = vmatprep.subr.mxu0 0.0
    %1474 = vmatpush1.msra.mxu0 0.0
    %1475 = vmatprep.subr.mxu0 0.0
    %1476 = vmatpush1.msra.mxu0 0.0
    %1477 = vmatprep.subr.mxu0 0.0
    %1478 = vmatpush1.msra.mxu0 0.0
    %1479 = vmatprep.subr.mxu0 0.0
    %1480 = vmatpush1.msra.mxu0 0.0
    %1481 = vmatprep.subr.mxu0 0.0
    %1482 = vmatpush1.msra.mxu0 0.0
    %1483 = vmatprep.subr.mxu0 0.0
    %1484 = vmatpush1.msra.mxu0 %v880
    %1485 = vmatprep.subr.mxu0 0.0
    %1486 = vmatpush1.msra.mxu0 %v879
    %1487 = vmatprep.subr.mxu0 0.0
    %1488 = vmatpush1.msra.mxu0 %v878
    %1489 = vmatprep.subr.mxu0 0.0
    %1490 = vmatpush1.msra.mxu0 %v877
    %1491 = vmatprep.subr.mxu0 0.0
    %1492 = vmatpush2.msra.mxu0 0.0
    %1493 = vmatprep.subr.mxu0 0.0
    %1494 = vmatpush2.msra.mxu0 0.0
    %1495 = vmatprep.subr.mxu0 0.0
    %1496 = vmatpush2.msra.mxu0 0.0
    %1497 = vmatprep.subr.mxu0 0.0
    %1498 = vmatpush2.msra.mxu0 0.0
    %1499 = vmatprep.subr.mxu0 0.0
    %1500 = vmatpush2.msra.mxu0 0.0
    %1501 = vmatprep.subr.mxu0 0.0
    %1502 = vmatpush2.msra.mxu0 0.0
    %1503 = vmatprep.subr.mxu0 0.0
    %1504 = vmatpush2.msra.mxu0 0.0
    %1505 = vmatprep.subr.mxu0 0.0
    %1506 = vmatpush2.msra.mxu0 0.0
    %1507 = vmatprep.subr.mxu0 0.0
    %1508 = vmatpush2.msra.mxu0 0.0
    %1509 = vmatprep.subr.mxu0 0.0
    %1510 = vmatpush2.msra.mxu0 0.0
    %1511 = vmatprep.subr.mxu0 0.0
    %1512 = vmatpush2.msra.mxu0 0.0
    %1513 = vmatprep.subr.mxu0 0.0
    %1514 = vmatpush2.msra.mxu0 0.0
    %1515 = vmatprep.subr.mxu0 0.0
    %1516 = vmatpush2.msra.mxu0 0.0
    %1517 = vmatprep.subr.mxu0 0.0
    %1518 = vmatpush2.msra.mxu0 0.0
    %1519 = vmatprep.subr.mxu0 0.0
    %1520 = vmatpush2.msra.mxu0 0.0
    %1521 = vmatprep.subr.mxu0 0.0
    %1522 = vmatpush2.msra.mxu0 0.0
    %1523 = vmatprep.mubr.f32.mxu0 0.0
    %1524 = vmatmul.mubr.f32.gmra.mxu0 %v1380
    %v1525 = vpop.f32.mrf.mxu0
    %v1526 = vadd.f32 0.0, %v1525
    %v1527 = vpop.f32.mrf.mxu0
    %1528 = vmatprep.mubr.f32.mxu0 0.0
    %1529 = vmatmul.mubr.f32.gmra.mxu0 %v1382
    %v1530 = vpop.f32.mrf.mxu0
    %v1531 = vadd.f32 0.0, %v1530
    %v1532 = vpop.f32.mrf.mxu0
    %1533 = vdwg.mxu0
    %1534 = vmatprep.subr.mxu0 0.0
    %1535 = vmatpush1.msra.mxu0 0.0
    %1536 = vmatprep.subr.mxu0 0.0
    %1537 = vmatpush1.msra.mxu0 0.0
    %1538 = vmatprep.subr.mxu0 0.0
    %1539 = vmatpush1.msra.mxu0 0.0
    %1540 = vmatprep.subr.mxu0 0.0
    %1541 = vmatpush1.msra.mxu0 0.0
    %1542 = vmatprep.subr.mxu0 0.0
    %1543 = vmatpush1.msra.mxu0 0.0
    %1544 = vmatprep.subr.mxu0 0.0
    %1545 = vmatpush1.msra.mxu0 0.0
    %1546 = vmatprep.subr.mxu0 0.0
    %1547 = vmatpush1.msra.mxu0 0.0
    %1548 = vmatprep.subr.mxu0 0.0
    %1549 = vmatpush1.msra.mxu0 0.0
    %1550 = vmatprep.subr.mxu0 0.0
    %1551 = vmatpush1.msra.mxu0 0.0
    %1552 = vmatprep.subr.mxu0 0.0
    %1553 = vmatpush1.msra.mxu0 0.0
    %1554 = vmatprep.subr.mxu0 0.0
    %1555 = vmatpush1.msra.mxu0 0.0
    %1556 = vmatprep.subr.mxu0 0.0
    %1557 = vmatpush1.msra.mxu0 0.0
    %1558 = vmatprep.subr.mxu0 0.0
    %1559 = vmatpush1.msra.mxu0 0.0
    %1560 = vmatprep.subr.mxu0 0.0
    %1561 = vmatpush1.msra.mxu0 0.0
    %1562 = vmatprep.subr.mxu0 0.0
    %1563 = vmatpush1.msra.mxu0 0.0
    %1564 = vmatprep.subr.mxu0 0.0
    %1565 = vmatpush1.msra.mxu0 %v1526
    %1566 = vmatprep.subr.mxu0 0.0
    %1567 = vmatpush2.msra.mxu0 0.0
    %1568 = vmatprep.subr.mxu0 0.0
    %1569 = vmatpush2.msra.mxu0 0.0
    %1570 = vmatprep.subr.mxu0 0.0
    %1571 = vmatpush2.msra.mxu0 0.0
    %1572 = vmatprep.subr.mxu0 0.0
    %1573 = vmatpush2.msra.mxu0 0.0
    %1574 = vmatprep.subr.mxu0 0.0
    %1575 = vmatpush2.msra.mxu0 0.0
    %1576 = vmatprep.subr.mxu0 0.0
    %1577 = vmatpush2.msra.mxu0 0.0
    %1578 = vmatprep.subr.mxu0 0.0
    %1579 = vmatpush2.msra.mxu0 0.0
    %1580 = vmatprep.subr.mxu0 0.0
    %1581 = vmatpush2.msra.mxu0 0.0
    %1582 = vmatprep.subr.mxu0 0.0
    %1583 = vmatpush2.msra.mxu0 0.0
    %1584 = vmatprep.subr.mxu0 0.0
    %1585 = vmatpush2.msra.mxu0 0.0
    %1586 = vmatprep.subr.mxu0 0.0
    %1587 = vmatpush2.msra.mxu0 0.0
    %1588 = vmatprep.subr.mxu0 0.0
    %1589 = vmatpush2.msra.mxu0 0.0
    %1590 = vmatprep.subr.mxu0 0.0
    %1591 = vmatpush2.msra.mxu0 0.0
    %1592 = vmatprep.subr.mxu0 0.0
    %1593 = vmatpush2.msra.mxu0 0.0
    %1594 = vmatprep.subr.mxu0 0.0
    %1595 = vmatpush2.msra.mxu0 0.0
    %1596 = vmatprep.subr.mxu0 0.0
    %1597 = vmatpush2.msra.mxu0 0.0
    %1598 = vmatprep.mubr.f32.mxu0 0.0
    %1599 = vmatmul.mubr.f32.gmra.mxu0 %v1035
    %v1600 = vpop.f32.mrf.mxu0
    %v1601 = vadd.f32 0.0, %v1600
    %v1602 = vpop.f32.mrf.mxu0
    %1603 = vdwg.mxu0
    %1604 = vmatprep.subr.mxu0 0.0
    %1605 = vmatpush1.msra.mxu0 0.0
    %1606 = vmatprep.subr.mxu0 0.0
    %1607 = vmatpush1.msra.mxu0 0.0
    %1608 = vmatprep.subr.mxu0 0.0
    %1609 = vmatpush1.msra.mxu0 0.0
    %1610 = vmatprep.subr.mxu0 0.0
    %1611 = vmatpush1.msra.mxu0 0.0
    %1612 = vmatprep.subr.mxu0 0.0
    %1613 = vmatpush1.msra.mxu0 0.0
    %1614 = vmatprep.subr.mxu0 0.0
    %1615 = vmatpush1.msra.mxu0 0.0
    %1616 = vmatprep.subr.mxu0 0.0
    %1617 = vmatpush1.msra.mxu0 0.0
    %1618 = vmatprep.subr.mxu0 0.0
    %1619 = vmatpush1.msra.mxu0 0.0
    %1620 = vmatprep.subr.mxu0 0.0
    %1621 = vmatpush1.msra.mxu0 0.0
    %1622 = vmatprep.subr.mxu0 0.0
    %1623 = vmatpush1.msra.mxu0 0.0
    %1624 = vmatprep.subr.mxu0 0.0
    %1625 = vmatpush1.msra.mxu0 0.0
    %1626 = vmatprep.subr.mxu0 0.0
    %1627 = vmatpush1.msra.mxu0 0.0
    %1628 = vmatprep.subr.mxu0 0.0
    %1629 = vmatpush1.msra.mxu0 0.0
    %1630 = vmatprep.subr.mxu0 0.0
    %1631 = vmatpush1.msra.mxu0 0.0
    %1632 = vmatprep.subr.mxu0 0.0
    %1633 = vmatpush1.msra.mxu0 0.0
    %1634 = vmatprep.subr.mxu0 0.0
    %1635 = vmatpush1.msra.mxu0 %v1531
    %1636 = vmatprep.subr.mxu0 0.0
    %1637 = vmatpush2.msra.mxu0 0.0
    %1638 = vmatprep.subr.mxu0 0.0
    %1639 = vmatpush2.msra.mxu0 0.0
    %1640 = vmatprep.subr.mxu0 0.0
    %1641 = vmatpush2.msra.mxu0 0.0
    %1642 = vmatprep.subr.mxu0 0.0
    %1643 = vmatpush2.msra.mxu0 0.0
    %1644 = vmatprep.subr.mxu0 0.0
    %1645 = vmatpush2.msra.mxu0 0.0
    %1646 = vmatprep.subr.mxu0 0.0
    %1647 = vmatpush2.msra.mxu0 0.0
    %1648 = vmatprep.subr.mxu0 0.0
    %1649 = vmatpush2.msra.mxu0 0.0
    %1650 = vmatprep.subr.mxu0 0.0
    %1651 = vmatpush2.msra.mxu0 0.0
    %1652 = vmatprep.subr.mxu0 0.0
    %1653 = vmatpush2.msra.mxu0 0.0
    %1654 = vmatprep.subr.mxu0 0.0
    %1655 = vmatpush2.msra.mxu0 0.0
    %1656 = vmatprep.subr.mxu0 0.0
    %1657 = vmatpush2.msra.mxu0 0.0
    %1658 = vmatprep.subr.mxu0 0.0
    %1659 = vmatpush2.msra.mxu0 0.0
    %1660 = vmatprep.subr.mxu0 0.0
    %1661 = vmatpush2.msra.mxu0 0.0
    %1662 = vmatprep.subr.mxu0 0.0
    %1663 = vmatpush2.msra.mxu0 0.0
    %1664 = vmatprep.subr.mxu0 0.0
    %1665 = vmatpush2.msra.mxu0 0.0
    %1666 = vmatprep.subr.mxu0 0.0
    %1667 = vmatpush2.msra.mxu0 0.0
    %1668 = vmatprep.mubr.f32.mxu0 0.0
    %1669 = vmatmul.mubr.f32.gmra.mxu0 %v1108
    %v1670 = vpop.f32.mrf.mxu0
    %v1671 = vadd.f32 0.0, %v1670
    %v1672 = vpop.f32.mrf.mxu0
    %1673 = vdwg.mxu0
    %1674 = vmatprep.subr.mxu0 0.0
    %1675 = vmatpush1.msra.mxu0 0.0
    %1676 = vmatprep.subr.mxu0 0.0
    %1677 = vmatpush1.msra.mxu0 0.0
    %1678 = vmatprep.subr.mxu0 0.0
    %1679 = vmatpush1.msra.mxu0 0.0
    %1680 = vmatprep.subr.mxu0 0.0
    %1681 = vmatpush1.msra.mxu0 0.0
    %1682 = vmatprep.subr.mxu0 0.0
    %1683 = vmatpush1.msra.mxu0 0.0
    %1684 = vmatprep.subr.mxu0 0.0
    %1685 = vmatpush1.msra.mxu0 0.0
    %1686 = vmatprep.subr.mxu0 0.0
    %1687 = vmatpush1.msra.mxu0 0.0
    %1688 = vmatprep.subr.mxu0 0.0
    %1689 = vmatpush1.msra.mxu0 0.0
    %1690 = vmatprep.subr.mxu0 0.0
    %1691 = vmatpush1.msra.mxu0 0.0
    %1692 = vmatprep.subr.mxu0 0.0
    %1693 = vmatpush1.msra.mxu0 0.0
    %1694 = vmatprep.subr.mxu0 0.0
    %1695 = vmatpush1.msra.mxu0 0.0
    %1696 = vmatprep.subr.mxu0 0.0
    %1697 = vmatpush1.msra.mxu0 0.0
    %1698 = vmatprep.subr.mxu0 0.0
    %1699 = vmatpush1.msra.mxu0 0.0
    %1700 = vmatprep.subr.mxu0 0.0
    %1701 = vmatpush1.msra.mxu0 0.0
    %1702 = vmatprep.subr.mxu0 0.0
    %1703 = vmatpush1.msra.mxu0 0.0
    %1704 = vmatprep.subr.mxu0 0.0
    %1705 = vmatpush1.msra.mxu0 %v1451
    %1706 = vmatprep.subr.mxu0 0.0
    %1707 = vmatpush2.msra.mxu0 0.0
    %1708 = vmatprep.subr.mxu0 0.0
    %1709 = vmatpush2.msra.mxu0 0.0
    %1710 = vmatprep.subr.mxu0 0.0
    %1711 = vmatpush2.msra.mxu0 0.0
    %1712 = vmatprep.subr.mxu0 0.0
    %1713 = vmatpush2.msra.mxu0 0.0
    %1714 = vmatprep.subr.mxu0 0.0
    %1715 = vmatpush2.msra.mxu0 0.0
    %1716 = vmatprep.subr.mxu0 0.0
    %1717 = vmatpush2.msra.mxu0 0.0
    %1718 = vmatprep.subr.mxu0 0.0
    %1719 = vmatpush2.msra.mxu0 0.0
    %1720 = vmatprep.subr.mxu0 0.0
    %1721 = vmatpush2.msra.mxu0 0.0
    %1722 = vmatprep.subr.mxu0 0.0
    %1723 = vmatpush2.msra.mxu0 0.0
    %1724 = vmatprep.subr.mxu0 0.0
    %1725 = vmatpush2.msra.mxu0 0.0
    %1726 = vmatprep.subr.mxu0 0.0
    %1727 = vmatpush2.msra.mxu0 0.0
    %1728 = vmatprep.subr.mxu0 0.0
    %1729 = vmatpush2.msra.mxu0 0.0
    %1730 = vmatprep.subr.mxu0 0.0
    %1731 = vmatpush2.msra.mxu0 0.0
    %1732 = vmatprep.subr.mxu0 0.0
    %1733 = vmatpush2.msra.mxu0 0.0
    %1734 = vmatprep.subr.mxu0 0.0
    %1735 = vmatpush2.msra.mxu0 0.0
    %1736 = vmatprep.subr.mxu0 0.0
    %1737 = vmatpush2.msra.mxu0 0.0
    %1738 = vmatprep.mubr.f32.mxu0 0.0
    %1739 = vmatmul.mubr.f32.gmra.mxu0 %v1181
    %v1740 = vpop.f32.mrf.mxu0
    %v1741 = vadd.f32 %v1601, %v1740
    %v1742 = vpop.f32.mrf.mxu0
    %1743 = vdwg.mxu0
    %1744 = vmatprep.subr.mxu0 0.0
    %1745 = vmatpush1.msra.mxu0 0.0
    %1746 = vmatprep.subr.mxu0 0.0
    %1747 = vmatpush1.msra.mxu0 0.0
    %1748 = vmatprep.subr.mxu0 0.0
    %1749 = vmatpush1.msra.mxu0 0.0
    %1750 = vmatprep.subr.mxu0 0.0
    %1751 = vmatpush1.msra.mxu0 0.0
    %1752 = vmatprep.subr.mxu0 0.0
    %1753 = vmatpush1.msra.mxu0 0.0
    %1754 = vmatprep.subr.mxu0 0.0
    %1755 = vmatpush1.msra.mxu0 0.0
    %1756 = vmatprep.subr.mxu0 0.0
    %1757 = vmatpush1.msra.mxu0 0.0
    %1758 = vmatprep.subr.mxu0 0.0
    %1759 = vmatpush1.msra.mxu0 0.0
    %1760 = vmatprep.subr.mxu0 0.0
    %1761 = vmatpush1.msra.mxu0 0.0
    %1762 = vmatprep.subr.mxu0 0.0
    %1763 = vmatpush1.msra.mxu0 0.0
    %1764 = vmatprep.subr.mxu0 0.0
    %1765 = vmatpush1.msra.mxu0 0.0
    %1766 = vmatprep.subr.mxu0 0.0
    %1767 = vmatpush1.msra.mxu0 0.0
    %1768 = vmatprep.subr.mxu0 0.0
    %1769 = vmatpush1.msra.mxu0 0.0
    %1770 = vmatprep.subr.mxu0 0.0
    %1771 = vmatpush1.msra.mxu0 0.0
    %1772 = vmatprep.subr.mxu0 0.0
    %1773 = vmatpush1.msra.mxu0 0.0
    %1774 = vmatprep.subr.mxu0 0.0
    %1775 = vmatpush1.msra.mxu0 %v1456
    %1776 = vmatprep.subr.mxu0 0.0
    %1777 = vmatpush2.msra.mxu0 0.0
    %1778 = vmatprep.subr.mxu0 0.0
    %1779 = vmatpush2.msra.mxu0 0.0
    %1780 = vmatprep.subr.mxu0 0.0
    %1781 = vmatpush2.msra.mxu0 0.0
    %1782 = vmatprep.subr.mxu0 0.0
    %1783 = vmatpush2.msra.mxu0 0.0
    %1784 = vmatprep.subr.mxu0 0.0
    %1785 = vmatpush2.msra.mxu0 0.0
    %1786 = vmatprep.subr.mxu0 0.0
    %1787 = vmatpush2.msra.mxu0 0.0
    %1788 = vmatprep.subr.mxu0 0.0
    %1789 = vmatpush2.msra.mxu0 0.0
    %1790 = vmatprep.subr.mxu0 0.0
    %1791 = vmatpush2.msra.mxu0 0.0
    %1792 = vmatprep.subr.mxu0 0.0
    %1793 = vmatpush2.msra.mxu0 0.0
    %1794 = vmatprep.subr.mxu0 0.0
    %1795 = vmatpush2.msra.mxu0 0.0
    %1796 = vmatprep.subr.mxu0 0.0
    %1797 = vmatpush2.msra.mxu0 0.0
    %1798 = vmatprep.subr.mxu0 0.0
    %1799 = vmatpush2.msra.mxu0 0.0
    %1800 = vmatprep.subr.mxu0 0.0
    %1801 = vmatpush2.msra.mxu0 0.0
    %1802 = vmatprep.subr.mxu0 0.0
    %1803 = vmatpush2.msra.mxu0 0.0
    %1804 = vmatprep.subr.mxu0 0.0
    %1805 = vmatpush2.msra.mxu0 0.0
    %1806 = vmatprep.subr.mxu0 0.0
    %1807 = vmatpush2.msra.mxu0 0.0
    %1808 = vmatprep.mubr.f32.mxu0 0.0
    %1809 = vmatmul.mubr.f32.gmra.mxu0 %v1254
    %v1810 = vpop.f32.mrf.mxu0
    %v1811 = vadd.f32 %v1671, %v1810
    %v1812 = vpop.f32.mrf.mxu0
    %1813 = vdwg.mxu0
    %v1814 = vadd.f32 %v865, %v1741
    %v1815 = vadd.f32 %v870, %v1811
    %v1816 = vxor.u32 %v1814, 2147483648
    %v1817 = vxor.u32 %v1815, 2147483648
    %v1818 = vmul.f32 %v1816, 1.442695
    %v1819 = vpow.pop %v1818
    %v1820 = vmul.f32 %v1817, 1.442695
    %v1821 = vpow.pop %v1820
    %v1822 = vadd.f32 %v1819, 1.0
    %v1823 = vadd.f32 %v1821, 1.0
    %v1824 = vrcp.pop %v1822
    %v1825 = vmul.f32 1.0, %v1824
    %v1826 = vrcp.pop %v1823
    %v1827 = vmul.f32 1.0, %v1826
    %v1828 = vmul.f32 %v1825, %v1360
    %v1829 = vmul.f32 %v1827, %v1361
    %1832 = vrot.lane.b32.xlu0 %v1825, 32
    %v1833 = vpop.permute.xlu0 %1832
    %1834 = vrot.lane.b32.xlu0 %v1827, 32
    %v1835 = vpop.permute.xlu0 %1834
    %v1838 = vmul.f32 %v1825, %v1833
    %v1839 = vmul.f32 %v1827, %v1835
    %1842 = vrot.lane.b32.xlu0 %v1838, 64
    %v1843 = vpop.permute.xlu0 %1842
    %1844 = vrot.lane.b32.xlu0 %v1839, 64
    %v1845 = vpop.permute.xlu0 %1844
    %v1848 = vadd.f32 %v1828, %v1843
    %v1849 = vadd.f32 %v1829, %v1845
    %v1850 = vtanh.pop %v1848
    %v1851 = vtanh.pop %v1849
    %1854 = vrot.lane.b32.xlu0 %v1850, 96
    %v1855 = vpop.permute.xlu0 %1854
    %1856 = vrot.lane.b32.xlu0 %v1851, 96
    %v1857 = vpop.permute.xlu0 %1856
    %v1860 = vmul.f32 %v1825, %v1855
    %v1861 = vmul.f32 %v1827, %v1857
    %v1862 = vld [vmem:[%s2] sm:$0xf]
    %v1863 = vlaneseq
    %v1864 = vshrl.u32 %v1863, 7
    %v1865 = vsub.s32 0, %v1864
    %v1866 = vrot.slane %v1862, %v1865
    %1868 = vbcast.lane.b32.xlu0 %v1866, 256
    %v1869 = vpop.permute.xlu0 %1868
    %v1870 = vlaneseq
    %v1871 = vshrl.u32 %v1870, 7
    %v1872 = vsub.s32 1, %v1871
    %v1873 = vrot.slane %v1862, %v1872
    %1875 = vbcast.lane.b32.xlu0 %v1873, 256
    %v1876 = vpop.permute.xlu0 %1875
    %v1877 = vadd.f32 %v1860, %v1869
    %v1878 = vadd.f32 %v1861, %v1876
    %vm1879 = vcmask 523520
    %v1880 = vsel %vm1879, %v1877, -inf
    %v1881 = vrot.slane %v1880, 4
    %v1882 = vmax.f32 %v1880, %v1881
    %v1883 = vrot.slane %v1882, 2
    %v1884 = vmax.f32 %v1882, %v1883
    %v1885 = vrot.slane %v1884, 1
    %v1886 = vmax.f32 %v1884, %v1885
    %v1887 = vsel %vm1879, %v1878, -inf
    %v1888 = vrot.slane %v1887, 4
    %v1889 = vmax.f32 %v1887, %v1888
    %v1890 = vrot.slane %v1889, 2
    %v1891 = vmax.f32 %v1889, %v1890
    %v1892 = vrot.slane %v1891, 1
    %v1893 = vmax.f32 %v1891, %v1892
    %v1894 = vlaneseq
    %v1895 = vshrl.u32 %v1894, 7
    %v1896 = vsub.s32 2, %v1895
    %v1897 = vrot.slane %v1862, %v1896
    %1899 = vbcast.lane.b32.xlu0 %v1897, 256
    %v1900 = vpop.permute.xlu0 %1899
    %v1901 = vlaneseq
    %v1902 = vshrl.u32 %v1901, 7
    %v1903 = vsub.s32 3, %v1902
    %v1904 = vrot.slane %v1862, %v1903
    %1906 = vbcast.lane.b32.xlu0 %v1904, 256
    %v1907 = vpop.permute.xlu0 %1906
    %v1908 = vadd.f32 %v1860, %v1900
    %v1909 = vadd.f32 %v1861, %v1907
    %v1910 = vsel %vm1879, %v1908, -inf
    %v1911 = vrot.slane %v1910, 4
    %v1912 = vmax.f32 %v1910, %v1911
    %v1913 = vrot.slane %v1912, 2
    %v1914 = vmax.f32 %v1912, %v1913
    %v1915 = vrot.slane %v1914, 1
    %v1916 = vmax.f32 %v1914, %v1915
    %v1917 = vsel %vm1879, %v1909, -inf
    %v1918 = vrot.slane %v1917, 4
    %v1919 = vmax.f32 %v1917, %v1918
    %v1920 = vrot.slane %v1919, 2
    %v1921 = vmax.f32 %v1919, %v1920
    %v1922 = vrot.slane %v1921, 1
    %v1923 = vmax.f32 %v1921, %v1922
    %v1926 = vsel %vm640, %v1893, %v1886
    %1927 = vrot.lane.b32.xlu0 %v1926, 96
    %v1928 = vpop.permute.xlu0 %1927
    %v1932 = vsel %vm640, %v1923, %v1916
    %v1934 = vsel %vm357, %v1928, %v1932
    %v1935 = vsel %vm791, %v1934, 1.0
    %vm1936 = vcmask 531456
    %v1937 = vsel %vm1936, %v1935, 0.0
    %v1938 = vld [vmem:[#allocation7] sm:$0xff]
    %v1939 = vld [vmem:[#allocation7 + $0x8] sm:$0xff]
    %v1940 = vld [vmem:[#allocation7 + $0x10] sm:$0xff]
    %v1941 = vld [vmem:[#allocation7 + $0x18] sm:$0xff]
    %v1942 = vld [vmem:[#allocation7 + $0x20] sm:$0xff]
    %v1943 = vld [vmem:[#allocation7 + $0x28] sm:$0xff]
    %v1944 = vld [vmem:[#allocation7 + $0x30] sm:$0xff]
    %v1945 = vld [vmem:[#allocation7 + $0x38] sm:$0xff]
    %v1946 = vld [vmem:[#allocation7 + $0x40] sm:$0xff]
    %vm1947 = vcmask 588800
    %v1949 = vsel %vm1947, %v1937, 0
    %1951 = vmatprep.subr.mxu0 0.0
    %1952 = vmatpush1.msra.mxu0 0.0
    %1953 = vmatprep.subr.mxu0 0.0
    %1954 = vmatpush1.msra.mxu0 0.0
    %1955 = vmatprep.subr.mxu0 0.0
    %1956 = vmatpush1.msra.mxu0 0.0
    %1957 = vmatprep.subr.mxu0 0.0
    %1958 = vmatpush1.msra.mxu0 0.0
    %1959 = vmatprep.subr.mxu0 0.0
    %1960 = vmatpush1.msra.mxu0 0.0
    %1961 = vmatprep.subr.mxu0 0.0
    %1962 = vmatpush1.msra.mxu0 0.0
    %1963 = vmatprep.subr.mxu0 0.0
    %1964 = vmatpush1.msra.mxu0 0.0
    %1965 = vmatprep.subr.mxu0 0.0
    %1966 = vmatpush1.msra.mxu0 %v1946
    %1967 = vmatprep.subr.mxu0 0.0
    %1968 = vmatpush1.msra.mxu0 %v1945
    %1969 = vmatprep.subr.mxu0 0.0
    %1970 = vmatpush1.msra.mxu0 %v1944
    %1971 = vmatprep.subr.mxu0 0.0
    %1972 = vmatpush1.msra.mxu0 %v1943
    %1973 = vmatprep.subr.mxu0 0.0
    %1974 = vmatpush1.msra.mxu0 %v1942
    %1975 = vmatprep.subr.mxu0 0.0
    %1976 = vmatpush1.msra.mxu0 %v1941
    %1977 = vmatprep.subr.mxu0 0.0
    %1978 = vmatpush1.msra.mxu0 %v1940
    %1979 = vmatprep.subr.mxu0 0.0
    %1980 = vmatpush1.msra.mxu0 %v1939
    %1981 = vmatprep.subr.mxu0 0.0
    %1982 = vmatpush1.msra.mxu0 %v1938
    %1983 = vmatprep.subr.mxu0 0.0
    %1984 = vmatpush2.msra.mxu0 0.0
    %1985 = vmatprep.subr.mxu0 0.0
    %1986 = vmatpush2.msra.mxu0 0.0
    %1987 = vmatprep.subr.mxu0 0.0
    %1988 = vmatpush2.msra.mxu0 0.0
    %1989 = vmatprep.subr.mxu0 0.0
    %1990 = vmatpush2.msra.mxu0 0.0
    %1991 = vmatprep.subr.mxu0 0.0
    %1992 = vmatpush2.msra.mxu0 0.0
    %1993 = vmatprep.subr.mxu0 0.0
    %1994 = vmatpush2.msra.mxu0 0.0
    %1995 = vmatprep.subr.mxu0 0.0
    %1996 = vmatpush2.msra.mxu0 0.0
    %1997 = vmatprep.subr.mxu0 0.0
    %1998 = vmatpush2.msra.mxu0 0.0
    %1999 = vmatprep.subr.mxu0 0.0
    %2000 = vmatpush2.msra.mxu0 0.0
    %2001 = vmatprep.subr.mxu0 0.0
    %2002 = vmatpush2.msra.mxu0 0.0
    %2003 = vmatprep.subr.mxu0 0.0
    %2004 = vmatpush2.msra.mxu0 0.0
    %2005 = vmatprep.subr.mxu0 0.0
    %2006 = vmatpush2.msra.mxu0 0.0
    %2007 = vmatprep.subr.mxu0 0.0
    %2008 = vmatpush2.msra.mxu0 0.0
    %2009 = vmatprep.subr.mxu0 0.0
    %2010 = vmatpush2.msra.mxu0 0.0
    %2011 = vmatprep.subr.mxu0 0.0
    %2012 = vmatpush2.msra.mxu0 0.0
    %2013 = vmatprep.subr.mxu0 0.0
    %2014 = vmatpush2.msra.mxu0 0.0
    %2015 = vmatprep.mubr.f32.mxu0 0.0
    %2016 = vmatmul.mubr.f32.gmra.mxu0 %v1949
    %v2017 = vpop.f32.mrf.mxu0
    %v2018 = vadd.f32 0.0, %v2017
    %v2019 = vpop.f32.mrf.mxu0
    %2020 = vdwg.mxu0
    %v2021 = vmax.f32 %v2018, 0.0
    %v2022 = vsel %vm357, %v2021, 1.0
    %vm2023 = vcmask 269312
    %v2024 = vsel %vm2023, %v2022, 0.0
    %v2025 = vld [vmem:[#allocation7 + $0x48] sm:$0xff]
    %v2026 = vld [vmem:[#allocation7 + $0x50] sm:$0xff]
    %v2027 = vld [vmem:[#allocation7 + $0x58] sm:$0xff]
    %v2028 = vld [vmem:[#allocation7 + $0x60] sm:$0xff]
    %v2029 = vld [vmem:[#allocation7 + $0x68] sm:$0xff]
    %vm2030 = vcmask 326656
    %v2032 = vsel %vm2030, %v2024, 0
    %2034 = vmatprep.subr.mxu0 0.0
    %2035 = vmatpush1.msra.mxu0 0.0
    %2036 = vmatprep.subr.mxu0 0.0
    %2037 = vmatpush1.msra.mxu0 0.0
    %2038 = vmatprep.subr.mxu0 0.0
    %2039 = vmatpush1.msra.mxu0 0.0
    %2040 = vmatprep.subr.mxu0 0.0
    %2041 = vmatpush1.msra.mxu0 0.0
    %2042 = vmatprep.subr.mxu0 0.0
    %2043 = vmatpush1.msra.mxu0 0.0
    %2044 = vmatprep.subr.mxu0 0.0
    %2045 = vmatpush1.msra.mxu0 0.0
    %2046 = vmatprep.subr.mxu0 0.0
    %2047 = vmatpush1.msra.mxu0 0.0
    %2048 = vmatprep.subr.mxu0 0.0
    %2049 = vmatpush1.msra.mxu0 0.0
    %2050 = vmatprep.subr.mxu0 0.0
    %2051 = vmatpush1.msra.mxu0 0.0
    %2052 = vmatprep.subr.mxu0 0.0
    %2053 = vmatpush1.msra.mxu0 0.0
    %2054 = vmatprep.subr.mxu0 0.0
    %2055 = vmatpush1.msra.mxu0 0.0
    %2056 = vmatprep.subr.mxu0 0.0
    %2057 = vmatpush1.msra.mxu0 %v2029
    %2058 = vmatprep.subr.mxu0 0.0
    %2059 = vmatpush1.msra.mxu0 %v2028
    %2060 = vmatprep.subr.mxu0 0.0
    %2061 = vmatpush1.msra.mxu0 %v2027
    %2062 = vmatprep.subr.mxu0 0.0
    %2063 = vmatpush1.msra.mxu0 %v2026
    %2064 = vmatprep.subr.mxu0 0.0
    %2065 = vmatpush1.msra.mxu0 %v2025
    %2066 = vmatprep.subr.mxu0 0.0
    %2067 = vmatpush2.msra.mxu0 0.0
    %2068 = vmatprep.subr.mxu0 0.0
    %2069 = vmatpush2.msra.mxu0 0.0
    %2070 = vmatprep.subr.mxu0 0.0
    %2071 = vmatpush2.msra.mxu0 0.0
    %2072 = vmatprep.subr.mxu0 0.0
    %2073 = vmatpush2.msra.mxu0 0.0
    %2074 = vmatprep.subr.mxu0 0.0
    %2075 = vmatpush2.msra.mxu0 0.0
    %2076 = vmatprep.subr.mxu0 0.0
    %2077 = vmatpush2.msra.mxu0 0.0
    %2078 = vmatprep.subr.mxu0 0.0
    %2079 = vmatpush2.msra.mxu0 0.0
    %2080 = vmatprep.subr.mxu0 0.0
    %2081 = vmatpush2.msra.mxu0 0.0
    %2082 = vmatprep.subr.mxu0 0.0
    %2083 = vmatpush2.msra.mxu0 0.0
    %2084 = vmatprep.subr.mxu0 0.0
    %2085 = vmatpush2.msra.mxu0 0.0
    %2086 = vmatprep.subr.mxu0 0.0
    %2087 = vmatpush2.msra.mxu0 0.0
    %2088 = vmatprep.subr.mxu0 0.0
    %2089 = vmatpush2.msra.mxu0 0.0
    %2090 = vmatprep.subr.mxu0 0.0
    %2091 = vmatpush2.msra.mxu0 0.0
    %2092 = vmatprep.subr.mxu0 0.0
    %2093 = vmatpush2.msra.mxu0 0.0
    %2094 = vmatprep.subr.mxu0 0.0
    %2095 = vmatpush2.msra.mxu0 0.0
    %2096 = vmatprep.subr.mxu0 0.0
    %2097 = vmatpush2.msra.mxu0 0.0
    %2098 = vmatprep.mubr.f32.mxu0 0.0
    %2099 = vmatmul.mubr.f32.gmra.mxu0 %v2032
    %v2100 = vpop.f32.mrf.mxu0
    %v2101 = vadd.f32 0.0, %v2100
    %v2102 = vpop.f32.mrf.mxu0
    %2103 = vdwg.mxu0
    %v2104 = vmax.f32 %v2101, 0.0
    %v2105 = vsel %vm357, %v2104, 1.0
    %v2106 = vsel %vm2023, %v2105, 0.0
    %v2107 = vld [vmem:[#allocation7 + $0x70] sm:$0xff]
    %v2108 = vld [vmem:[#allocation7 + $0x78] sm:$0xff]
    %v2109 = vld [vmem:[#allocation7 + $0x80] sm:$0xff]
    %v2110 = vld [vmem:[#allocation7 + $0x88] sm:$0xff]
    %v2111 = vld [vmem:[#allocation7 + $0x90] sm:$0xff]
    %v2113 = vsel %vm2030, %v2106, 0
    %2115 = vmatprep.subr.mxu0 0.0
    %2116 = vmatpush1.msra.mxu0 0.0
    %2117 = vmatprep.subr.mxu0 0.0
    %2118 = vmatpush1.msra.mxu0 0.0
    %2119 = vmatprep.subr.mxu0 0.0
    %2120 = vmatpush1.msra.mxu0 0.0
    %2121 = vmatprep.subr.mxu0 0.0
    %2122 = vmatpush1.msra.mxu0 0.0
    %2123 = vmatprep.subr.mxu0 0.0
    %2124 = vmatpush1.msra.mxu0 0.0
    %2125 = vmatprep.subr.mxu0 0.0
    %2126 = vmatpush1.msra.mxu0 0.0
    %2127 = vmatprep.subr.mxu0 0.0
    %2128 = vmatpush1.msra.mxu0 0.0
    %2129 = vmatprep.subr.mxu0 0.0
    %2130 = vmatpush1.msra.mxu0 0.0
    %2131 = vmatprep.subr.mxu0 0.0
    %2132 = vmatpush1.msra.mxu0 0.0
    %2133 = vmatprep.subr.mxu0 0.0
    %2134 = vmatpush1.msra.mxu0 0.0
    %2135 = vmatprep.subr.mxu0 0.0
    %2136 = vmatpush1.msra.mxu0 0.0
    %2137 = vmatprep.subr.mxu0 0.0
    %2138 = vmatpush1.msra.mxu0 %v2111
    %2139 = vmatprep.subr.mxu0 0.0
    %2140 = vmatpush1.msra.mxu0 %v2110
    %2141 = vmatprep.subr.mxu0 0.0
    %2142 = vmatpush1.msra.mxu0 %v2109
    %2143 = vmatprep.subr.mxu0 0.0
    %2144 = vmatpush1.msra.mxu0 %v2108
    %2145 = vmatprep.subr.mxu0 0.0
    %2146 = vmatpush1.msra.mxu0 %v2107
    %2147 = vmatprep.subr.mxu0 0.0
    %2148 = vmatpush2.msra.mxu0 0.0
    %2149 = vmatprep.subr.mxu0 0.0
    %2150 = vmatpush2.msra.mxu0 0.0
    %2151 = vmatprep.subr.mxu0 0.0
    %2152 = vmatpush2.msra.mxu0 0.0
    %2153 = vmatprep.subr.mxu0 0.0
    %2154 = vmatpush2.msra.mxu0 0.0
    %2155 = vmatprep.subr.mxu0 0.0
    %2156 = vmatpush2.msra.mxu0 0.0
    %2157 = vmatprep.subr.mxu0 0.0
    %2158 = vmatpush2.msra.mxu0 0.0
    %2159 = vmatprep.subr.mxu0 0.0
    %2160 = vmatpush2.msra.mxu0 0.0
    %2161 = vmatprep.subr.mxu0 0.0
    %2162 = vmatpush2.msra.mxu0 0.0
    %2163 = vmatprep.subr.mxu0 0.0
    %2164 = vmatpush2.msra.mxu0 0.0
    %2165 = vmatprep.subr.mxu0 0.0
    %2166 = vmatpush2.msra.mxu0 0.0
    %2167 = vmatprep.subr.mxu0 0.0
    %2168 = vmatpush2.msra.mxu0 0.0
    %2169 = vmatprep.subr.mxu0 0.0
    %2170 = vmatpush2.msra.mxu0 0.0
    %2171 = vmatprep.subr.mxu0 0.0
    %2172 = vmatpush2.msra.mxu0 0.0
    %2173 = vmatprep.subr.mxu0 0.0
    %2174 = vmatpush2.msra.mxu0 0.0
    %2175 = vmatprep.subr.mxu0 0.0
    %2176 = vmatpush2.msra.mxu0 0.0
    %2177 = vmatprep.subr.mxu0 0.0
    %2178 = vmatpush2.msra.mxu0 0.0
    %2179 = vmatprep.mubr.f32.mxu0 0.0
    %2180 = vmatmul.mubr.f32.gmra.mxu0 %v2113
    %v2181 = vpop.f32.mrf.mxu0
    %v2182 = vadd.f32 0.0, %v2181
    %v2183 = vpop.f32.mrf.mxu0
    %2184 = vdwg.mxu0
    %2185 = vst [vmem:[#allocation8] sm:$0x3] %v2182
    // Predicated region
    $region38: #{tpu_custom_call.1} parent=1 // pred_check
      _
    $region39: #{tpu_custom_call.1} parent=1 // pred_check_branch
      %2187 = sbr.rel (0) target = $region41
    $region40: #{tpu_custom_call.1} parent=1 // pred_region
      %s2189 = ssub.s32 32, 32
      %2190 = vsyncadd [#allocation4], %s2189
      %s2192 = sshll.u32 [#allocation8], 4
      %s2193 = int_to_ptr.vmem [resolvable:$true] %s2192
      %2195 = dma.vmem_to_hbm [thread:$0]  %s2193, 32, %s6, [#allocation4]
    $region41: #{tpu_custom_call.1} parent=1 // pred_fallthru
      _
    // Predicated region
    $region42: #{tpu_custom_call.1} parent=1 // pred_check
      _
    $region43: #{tpu_custom_call.1} parent=1 // pred_check_branch
      %2197 = sbr.rel (0) target = $region45
    $region44: #{tpu_custom_call.1} parent=1 // pred_region
      %2198 = dma.done [#allocation4], 32
    $region45: #{tpu_custom_call.1} parent=1 // pred_fallthru
      _
    %2199 = vsyncpa [#allocation3], 1
    %2200 = vsyncpa [#allocation6], 1
    %2201 = vsyncpa [#allocation4], 1

</llo_original>
